<compile_context>
chip_gen: v7x
topology: tpu7x:2x2x1
jax: 0.10.0
libtpu: 0.0.40
codegen_flags: <defaults>
</compile_context>

<pallas_src>
import functools
import math

import jax
import jax.numpy as jnp
from jax import lax
from jax.experimental import pallas as pl
from jax.experimental.pallas import tpu as pltpu

EPS = 1e-5          # nn.BatchNorm1d eps
NEG_SLOPE = 0.01    # nn.LeakyReLU(negative_slope=0.01)


def _leaky(x):
    return jnp.maximum(x, NEG_SLOPE * x)


def _bn_train(x, gamma, beta):
    # nn.BatchNorm1d, training mode: batch mean + biased variance.
    # Two-pass (shifted) statistics avoid E[x^2]-E[x]^2 cancellation.
    m = jnp.mean(x, axis=0, keepdims=True)
    d = x - m
    var = jnp.mean(d * d, axis=0, keepdims=True)
    return d * lax.rsqrt(var + EPS) * gamma + beta


def _mm(a, b):
    # Network GEMM: bf16 MXU operands, f32 accumulation.
    return jnp.dot(a.astype(jnp.bfloat16), b.astype(jnp.bfloat16),
                   preferred_element_type=jnp.float32)


def _mm32(a, b):
    # Exact f32 matmul for the 0/1 rollout "plumbing" matrices.
    return jnp.dot(a, b, preferred_element_type=jnp.float32)


def _decoder_kernel(
    # data-dependent operands
    pre_msg_ref,   # (B*E, 2F) bf16  [receivers || senders], rows grouped by batch
    pre_h_ref,     # (B*M, F)  bf16  hyper-edge pre-messages
    zc_ref,        # (B*E, 1)  f32   mean_k Z_CG
    zh_ref,        # (B*M, 1)  f32   mean_k Z_HG
    send_t_ref,    # (B, N, E) bf16  rel_send_g^T / n_in_node (broadcast over b)
    ihg_ref,       # (B, N, M) bf16  I_HG / n_in_node
    ins_sel_ref,   # (B*N, S*D) f32  burn-in anchor per step (lane-dense)
    ins_msk_ref,   # (B*N, S*D) f32  burn-in inputs, zero after burn-in
    noise_ref,     # (B*N, S*D) f32  N(0,1) noise, lane-dense
    # rollout plumbing matrices (exact 0/1 or small-int valued, f32)
    lmat_ref,      # (S*D, S*D)      per-dim prefix-window of the noise
    td2_ref,       # (D,   S*D)      step-count replication of pred_core
    shiftm_ref,    # (S*D, S*D)      "previous prediction" shift (post burn-in)
    tkd_ref,       # (K*D, S*K*D)    mu_raw replication across steps
    tp_ref,        # (S*D, S*K*D)    prev-state replication across mixture cores
    ae_ref,        # (K,   K*D)      alpha -> per-core expansion
    sd_ref,        # (K*D, D)        sum over cores
    # parameters (linear weights stored (in, out); bf16 for the MXU)
    w_first, b_first, bn1g_g, bn1g_b,
    f2g_w, f2g_b, bn2g_g, bn2g_b,
    f1h_w, f1h_b, bn1h_g, bn1h_b,
    f2h_w, f2h_b, bn2h_g, bn2h_b,
    o1_w, o1_b, w_head, b_head,
    # outputs
    pred_ref,      # (B*N, S*D)    f32
    alpha_ref,     # (B*N, K)      f32 (time-invariant)
    mu_ref,        # (B*N, S*K*D)  f32
    *, n_batch, n_hid,
):
    B, H = n_batch, n_hid
    K = alpha_ref.shape[-1]

    # ---------------- CG (graph) message passing ----------------
    # one fused GEMM: [msg_fc1_g | shortcut] applied to [receivers || senders]
    first = _mm(pre_msg_ref[...], w_first[...]) + b_first[...]        # (B*E, 2H)
    msg = _leaky(_bn_train(first[:, :H], bn1g_g[...], bn1g_b[...]))
    shortcut = first[:, H:]
    msg = _leaky(_bn_train(_mm(msg, f2g_w[...]) + f2g_b[...],
                           bn2g_g[...], bn2g_b[...]))
    # (msg.unsqueeze(-1) * Z_CG).mean(-1) == msg * mean_k(Z_CG)
    all_msgs = _leaky(msg * zc_ref[...] + shortcut)                    # (B*E, H)
    all_msgs3 = all_msgs.reshape(B, -1, H).astype(jnp.bfloat16)        # (B, E, H)
    # per-batch aggregation by sender node (1/n_in_node folded into send_t)
    hidden_g = lax.dot_general(
        send_t_ref[...], all_msgs3,
        dimension_numbers=(((2,), (1,)), ((0,), (0,))),
        preferred_element_type=jnp.float32)                            # (B, N, H)

    # ---------------- HG (hypergraph) message passing (pre_train=False) ----
    h = _leaky(_bn_train(_mm(pre_h_ref[...], f1h_w[...]) + f1h_b[...],
                         bn1h_g[...], bn1h_b[...]))
    h = _leaky(_bn_train(_mm(h, f2h_w[...]) + f2h_b[...],
                         bn2h_g[...], bn2h_b[...]))
    all_h3 = (h * zh_ref[...]).reshape(B, -1, H).astype(jnp.bfloat16)  # (B, M, H)
    hidden_hg = lax.dot_general(
        ihg_ref[...], all_h3,
        dimension_numbers=(((2,), (1,)), ((0,), (0,))),
        preferred_element_type=jnp.float32)                            # (B, N, H)

    # ---------------- output head (time-invariant) ----------------
    hcat = jnp.concatenate([hidden_g.reshape(-1, H),
                            hidden_hg.reshape(-1, H)], axis=-1)        # (B*N, 2H)
    vout = _leaky(_mm(hcat, o1_w[...]) + o1_b[...])                    # (B*N, H)
    head = _mm(vout, w_head[...]) + b_head[...]                        # (B*N, K+K*D)

    logits = head[:, :K]
    mu_raw = head[:, K:]                                               # (B*N, K*D)
    logits = logits - jnp.max(logits, axis=-1, keepdims=True)
    ex = jnp.exp(logits)
    alpha = ex / jnp.sum(ex, axis=-1, keepdims=True)                   # (B*N, K)
    alpha_ref[...] = alpha

    # TODO(synk): `sample_core` is undefined in the reference source; we use
    # the mixture expectation sum_k alpha_k * mu_k (exact for num_cores == 1).
    pred_core = _mm32(mu_raw * _mm32(alpha, ae_ref[...]), sd_ref[...])  # (B*N, D)

    # ---------------- closed-form vectorized rollout ----------------
    # pred[t] = anchor[t] + coef[t]*pred_core + window-sum of noise
    pred = (ins_sel_ref[...] + _mm32(pred_core, td2_ref[...])
            + _mm32(noise_ref[...], lmat_ref[...]))                    # (B*N, S*D)
    pred_ref[...] = pred
    # prev[t] = burn-in input (t<burn) else pred[t-1];  mu[t] = mu_raw + prev[t]
    prev = ins_msk_ref[...] + _mm32(pred, shiftm_ref[...])             # (B*N, S*D)
    mu_ref[...] = _mm32(mu_raw, tkd_ref[...]) + _mm32(prev, tp_ref[...])


def _rollout_matrices(S, D, K, nb):
    """Exact 0/1 (and small-int) matrices implementing the time recurrence."""
    f32 = jnp.float32
    sd, kd, skd = S * D, K * D, S * K * D
    c = jnp.arange(sd)
    t_c, d_c = c // D, c % D          # column step / dim
    r = jnp.arange(sd)
    t_r, d_r = r // D, r % D          # row step / dim
    same_d = d_r[:, None] == d_c[None, :]

    head = (t_c[None, :] < nb) & (t_r[:, None] == t_c[None, :])
    tail = ((t_c[None, :] >= nb) & (t_r[:, None] >= nb - 1)
            & (t_r[:, None] <= t_c[None, :]))
    lmat = (same_d & (head | tail)).astype(f32)                         # (S*D, S*D)

    coef = jnp.maximum(t_c - nb + 2, 1).astype(f32)                     # per column
    td2 = (jnp.arange(D)[:, None] == d_c[None, :]).astype(f32) * coef[None, :]

    shiftm = (same_d & (t_c[None, :] >= nb)
              & (t_r[:, None] == t_c[None, :] - 1)).astype(f32)         # (S*D, S*D)

    ck = jnp.arange(skd)
    t_k, j_k = ck // kd, ck % kd
    tkd = (jnp.arange(kd)[:, None] == j_k[None, :]).astype(f32)         # (K*D, S*K*D)
    tp = ((t_r[:, None] == t_k[None, :])
          & (d_r[:, None] == (j_k % D)[None, :])).astype(f32)           # (S*D, S*K*D)

    jk = jnp.arange(kd)
    ae = (jnp.arange(K)[:, None] == (jk // D)[None, :]).astype(f32)     # (K, K*D)
    sdm = ((jk % D)[:, None] == jnp.arange(D)[None, :]).astype(f32)     # (K*D, D)
    return lmat, td2, shiftm, tkd, tp, ae, sdm


def rnn_decoder_forward(params, data, rel_type_g, rel_rec_g, rel_send_g,
                        rel_type_hg, I_HG, output_steps, v_combined,
                        burn_in_steps=1, noise_key=None):
    f32, bf16 = jnp.float32, jnp.bfloat16
    if noise_key is None:
        noise_key = jax.random.PRNGKey(0)

    inputs = jnp.transpose(data, (0, 2, 1, 3)).astype(f32)   # (B, T, N, D)
    B, T, N, D = inputs.shape
    E = rel_rec_g.shape[0]
    M = I_HG.shape[-1]
    Fdim = v_combined.shape[-1]
    H = params["f1g_w"].shape[1]
    K = params["wa_w"].shape[1]
    S = int(output_steps)
    R = B * N
    nb = max(1, min(int(burn_in_steps), S, T))
    inv_d = 1.0 / float(D)      # reference divides agg_msgs by inputs.size(2)

    vc = v_combined.astype(f32)

    # ---- one-time layout plumbing / gathers (wrapper side) ----
    recv = jnp.einsum('en,bnf->bef', rel_rec_g.astype(f32), vc)         # (B, E, F)
    send = jnp.einsum('en,bnf->bef', rel_send_g.astype(f32), vc)        # (B, E, F)
    pre_msg = jnp.concatenate([recv, send], -1).reshape(B * E, 2 * Fdim).astype(bf16)
    pre_h = jnp.einsum('bnm,bnf->bmf', I_HG.astype(f32), vc).reshape(B * M, Fdim).astype(bf16)
    zc = jnp.mean(rel_type_g.astype(f32), axis=-1).reshape(B * E, 1)
    zh = jnp.mean(rel_type_hg.astype(f32), axis=-1).reshape(B * M, 1)
    send_t = jnp.broadcast_to((rel_send_g.astype(f32).T * inv_d)[None], (B, N, E)).astype(bf16)
    ihg = (I_HG.astype(f32) * inv_d).astype(bf16)

    # ---- rollout operands, lane-dense (rows, steps*dim) ----
    step_src = jnp.minimum(jnp.arange(S), nb - 1)
    ins_sel = inputs[:, step_src]                                       # (B, S, N, D)
    ins_sel = jnp.transpose(ins_sel, (0, 2, 1, 3)).reshape(R, S * D)
    msk = (jnp.arange(S) < nb).astype(f32)
    ins_msk = ins_sel * jnp.repeat(msk, D)[None, :]
    noise = jax.random.normal(noise_key, (R, S * D), f32)
    lmat, td2, shiftm, tkd, tp, ae, sdm = _rollout_matrices(S, D, K, nb)

    # ---- fused / widened parameter tensors ----
    w_first = jnp.concatenate([params["f1g_w"], params["sc_w"]], 1).astype(bf16)
    b_first = jnp.concatenate([params["f1g_b"], params["sc_b"]], 1).astype(f32)
    w_head = jnp.concatenate([params["wa_w"], params["wm_w"]], 1).astype(bf16)
    b_head = jnp.concatenate([params["wa_b"], params["wm_b"]], 1).astype(f32)

    operands = [
        pre_msg, pre_h, zc, zh, send_t, ihg,
        ins_sel, ins_msk, noise,
        lmat, td2, shiftm, tkd, tp, ae, sdm,
        w_first, b_first, params["bn1g_g"], params["bn1g_b"],
        params["f2g_w"].astype(bf16), params["f2g_b"], params["bn2g_g"], params["bn2g_b"],
        params["f1h_w"].astype(bf16), params["f1h_b"], params["bn1h_g"], params["bn1h_b"],
        params["f2h_w"].astype(bf16), params["f2h_b"], params["bn2h_g"], params["bn2h_b"],
        params["o1_w"].astype(bf16), params["o1_b"],
        w_head, b_head,
    ]

    kernel = functools.partial(_decoder_kernel, n_batch=B, n_hid=H)
    out_shape = (
        jax.ShapeDtypeStruct((R, S * D), f32),        # pred  (lane-dense)
        jax.ShapeDtypeStruct((R, K), f32),            # alpha (time-invariant)
        jax.ShapeDtypeStruct((R, S * K * D), f32),    # mu    (lane-dense)
    )
    vspec = lambda: pl.BlockSpec(memory_space=pltpu.MemorySpace.VMEM)
    pred2, alpha, mu2 = pl.pallas_call(
        kernel,
        out_shape=out_shape,
        in_specs=[vspec() for _ in operands],
        out_specs=tuple(vspec() for _ in range(3)),
    )(*operands)

    # ---- reshape back to the module's output layout ----
    preds = pred2.reshape(B, N, S, D)
    alphas = jnp.broadcast_to(alpha.reshape(B, N, 1, K), (B, N, S, K))
    mus = mu2.reshape(B, N, S, K, D)
    sigmas = jnp.ones((B, N, S, K, D), f32)
    return preds, alphas, mus, sigmas


def init_params(key, n_in_mlp, in_hyper, n_hid, num_cores, dim):
    ks = jax.random.split(key, 8)

    def lin(k, n_in, n_out):
        w = jax.random.normal(k, (n_in, n_out), jnp.float32) * (1.0 / math.sqrt(n_in))
        b = jnp.full((1, n_out), 0.1, jnp.float32)
        return w, b

    def bn(n):
        return jnp.ones((1, n), jnp.float32), jnp.zeros((1, n), jnp.float32)

    p = {}
    p["sc_w"], p["sc_b"] = lin(ks[0], n_in_mlp, n_hid)          # shortcut
    p["f1g_w"], p["f1g_b"] = lin(ks[1], n_in_mlp, n_hid)        # msg_fc1_g
    p["bn1g_g"], p["bn1g_b"] = bn(n_hid)
    p["f2g_w"], p["f2g_b"] = lin(ks[2], n_hid, n_hid)           # msg_fc2_g
    p["bn2g_g"], p["bn2g_b"] = bn(n_hid)
    p["f1h_w"], p["f1h_b"] = lin(ks[3], in_hyper, n_hid)        # msg_fc1_hg
    p["bn1h_g"], p["bn1h_b"] = bn(n_hid)
    p["f2h_w"], p["f2h_b"] = lin(ks[4], n_hid, n_hid)           # msg_fc2_hg
    p["bn2h_g"], p["bn2h_b"] = bn(n_hid)
    p["o1_w"], p["o1_b"] = lin(ks[5], 2 * n_hid, n_hid)         # out_fc1
    p["wa_w"], p["wa_b"] = lin(ks[6], n_hid, num_cores)         # W_alpha
    p["wm_w"], p["wm_b"] = lin(ks[7], n_hid, num_cores * dim)   # W_mu
    return p


if __name__ == "__main__":
    # Small shapes consistent with the module's forward (E, M, N multiples of 8
    # so in-kernel leading-dim reshapes are layout-preserving).
    B, N, T, D = 2, 8, 6, 4            # batch, nodes, time, n_in_node
    in_hyper = 8                       # v_combined feature dim (= n_in_mlp / 2)
    n_in_mlp = 2 * in_hyper            # 16
    n_hid = 32
    edge_types, edge_types_hg = 2, 2
    M = 8                              # number of hyperedges
    num_cores = 1
    output_steps, burn_in_steps = 3, 1

    root = jax.random.PRNGKey(0)
    k_data, k_v, k_zg, k_zhg, k_ihg, k_param = jax.random.split(root, 6)

    data = jax.random.normal(k_data, (B, N, T, D), jnp.float32)
    v_combined = jax.random.normal(k_v, (B, N, in_hyper), jnp.float32)

    # Fully connected directed graph (no self loops) -> one-hot incidence.
    pairs = [(i, j) for i in range(N) for j in range(N) if i != j]
    E = len(pairs)                                                   # 56
    recv_idx = jnp.array([i for i, _ in pairs], jnp.int32)
    send_idx = jnp.array([j for _, j in pairs], jnp.int32)
    rel_rec_g = jax.nn.one_hot(recv_idx, N, dtype=jnp.float32)       # (E, N)
    rel_send_g = jax.nn.one_hot(send_idx, N, dtype=jnp.float32)      # (E, N)

    rel_type_g = jax.nn.softmax(
        jax.random.normal(k_zg, (B, E, edge_types), jnp.float32), axis=-1)
    rel_type_hg = jax.nn.softmax(
        jax.random.normal(k_zhg, (B, M, edge_types_hg), jnp.float32), axis=-1)
    I_HG = (jax.random.uniform(k_ihg, (B, N, M)) > 0.5).astype(jnp.float32)

    params = init_params(k_param, n_in_mlp, in_hyper, n_hid, num_cores, D)

    preds, alphas, mus, sigmas = rnn_decoder_forward(
        params, data, rel_type_g, rel_rec_g, rel_send_g, rel_type_hg, I_HG,
        output_steps, v_combined, burn_in_steps=burn_in_steps,
        noise_key=jax.random.PRNGKey(42))

    jax.block_until_ready((preds, alphas, mus, sigmas))
    assert preds.shape == (B, N, output_steps, D)
    assert alphas.shape == (B, N, output_steps, num_cores)
    assert mus.shape == (B, N, output_steps, num_cores, D)
    assert sigmas.shape == (B, N, output_steps, num_cores, D)
    assert bool(jnp.isfinite(preds).all())
    assert bool(jnp.isfinite(alphas).all())
    assert bool(jnp.isfinite(mus).all())
    print("KERNEL_OK")
</pallas_src>

<mosaic_0001>
module attributes {stable_mosaic.version = 11 : i64} {
  func.func @_decoder_kernel(%arg0: memref<112x16xbf16, #tpu.memory_space<vmem>>, %arg1: memref<16x8xbf16, #tpu.memory_space<vmem>>, %arg2: memref<112x1xf32, #tpu.memory_space<vmem>>, %arg3: memref<16x1xf32, #tpu.memory_space<vmem>>, %arg4: memref<2x8x56xbf16, #tpu.memory_space<vmem>>, %arg5: memref<2x8x8xbf16, #tpu.memory_space<vmem>>, %arg6: memref<16x12xf32, #tpu.memory_space<vmem>>, %arg7: memref<16x12xf32, #tpu.memory_space<vmem>>, %arg8: memref<16x12xf32, #tpu.memory_space<vmem>>, %arg9: memref<12x12xf32, #tpu.memory_space<vmem>>, %arg10: memref<4x12xf32, #tpu.memory_space<vmem>>, %arg11: memref<12x12xf32, #tpu.memory_space<vmem>>, %arg12: memref<4x12xf32, #tpu.memory_space<vmem>>, %arg13: memref<12x12xf32, #tpu.memory_space<vmem>>, %arg14: memref<1x4xf32, #tpu.memory_space<vmem>>, %arg15: memref<4x4xf32, #tpu.memory_space<vmem>>, %arg16: memref<16x64xbf16, #tpu.memory_space<vmem>>, %arg17: memref<1x64xf32, #tpu.memory_space<vmem>>, %arg18: memref<1x32xf32, #tpu.memory_space<vmem>>, %arg19: memref<1x32xf32, #tpu.memory_space<vmem>>, %arg20: memref<32x32xbf16, #tpu.memory_space<vmem>>, %arg21: memref<1x32xf32, #tpu.memory_space<vmem>>, %arg22: memref<1x32xf32, #tpu.memory_space<vmem>>, %arg23: memref<1x32xf32, #tpu.memory_space<vmem>>, %arg24: memref<8x32xbf16, #tpu.memory_space<vmem>>, %arg25: memref<1x32xf32, #tpu.memory_space<vmem>>, %arg26: memref<1x32xf32, #tpu.memory_space<vmem>>, %arg27: memref<1x32xf32, #tpu.memory_space<vmem>>, %arg28: memref<32x32xbf16, #tpu.memory_space<vmem>>, %arg29: memref<1x32xf32, #tpu.memory_space<vmem>>, %arg30: memref<1x32xf32, #tpu.memory_space<vmem>>, %arg31: memref<1x32xf32, #tpu.memory_space<vmem>>, %arg32: memref<64x32xbf16, #tpu.memory_space<vmem>>, %arg33: memref<1x32xf32, #tpu.memory_space<vmem>>, %arg34: memref<32x5xbf16, #tpu.memory_space<vmem>>, %arg35: memref<1x5xf32, #tpu.memory_space<vmem>>, %arg36: memref<16x12xf32, #tpu.memory_space<vmem>>, %arg37: memref<16x1xf32, #tpu.memory_space<vmem>>, %arg38: memref<16x12xf32, #tpu.memory_space<vmem>>) attributes {dimension_semantics = [], scalar_prefetch = 0 : i64, scratch_operands = 0 : i64, tpu.core_type = #tpu.core_type<tc>} {
    %c0 = arith.constant 0 : index
    %c0_0 = arith.constant 0 : index
    %0 = vector.load %arg0[%c0, %c0_0] : memref<112x16xbf16, #tpu.memory_space<vmem>>, vector<112x16xbf16>
    %c0_1 = arith.constant 0 : index
    %c0_2 = arith.constant 0 : index
    %1 = vector.load %arg16[%c0_1, %c0_2] : memref<16x64xbf16, #tpu.memory_space<vmem>>, vector<16x64xbf16>
    %cst = arith.constant dense<0.000000e+00> : vector<112x64xf32>
    %2 = tpu.matmul %0, %1, %cst {dimension_numbers = #tpu.dot_dimension_numbers<[1], [0], [0], [1], [0, 0, 1, 1], [], []>} : vector<112x16xbf16>, vector<16x64xbf16>, vector<112x64xf32> -> vector<112x64xf32>
    %c0_3 = arith.constant 0 : index
    %c0_4 = arith.constant 0 : index
    %3 = vector.load %arg17[%c0_3, %c0_4] : memref<1x64xf32, #tpu.memory_space<vmem>>, vector<1x64xf32>
    %4 = vector.broadcast %3 : vector<1x64xf32> to vector<112x64xf32>
    %5 = arith.addf %2, %4 : vector<112x64xf32>
    %6 = vector.extract_strided_slice %5 {offsets = [0, 0], sizes = [112, 32], strides = [1, 1]} : vector<112x64xf32> to vector<112x32xf32>
    %c0_5 = arith.constant 0 : index
    %c0_6 = arith.constant 0 : index
    %7 = vector.load %arg18[%c0_5, %c0_6] : memref<1x32xf32, #tpu.memory_space<vmem>>, vector<1x32xf32>
    %c0_7 = arith.constant 0 : index
    %c0_8 = arith.constant 0 : index
    %8 = vector.load %arg19[%c0_7, %c0_8] : memref<1x32xf32, #tpu.memory_space<vmem>>, vector<1x32xf32>
    %cst_9 = arith.constant dense<0.000000e+00> : vector<32xf32>
    %9 = vector.multi_reduction <add>, %6, %cst_9 [0] : vector<112x32xf32> to vector<32xf32>
    %10 = vector.shape_cast %9 : vector<32xf32> to vector<1x32xf32>
    %cst_10 = arith.constant 1.120000e+02 : f32
    %11 = vector.broadcast %cst_10 : f32 to vector<1x32xf32>
    %12 = arith.divf %10, %11 : vector<1x32xf32>
    %13 = vector.broadcast %12 : vector<1x32xf32> to vector<112x32xf32>
    %14 = arith.subf %6, %13 : vector<112x32xf32>
    %15 = arith.mulf %14, %14 : vector<112x32xf32>
    %cst_11 = arith.constant dense<0.000000e+00> : vector<32xf32>
    %16 = vector.multi_reduction <add>, %15, %cst_11 [0] : vector<112x32xf32> to vector<32xf32>
    %17 = vector.shape_cast %16 : vector<32xf32> to vector<1x32xf32>
    %cst_12 = arith.constant 1.120000e+02 : f32
    %18 = vector.broadcast %cst_12 : f32 to vector<1x32xf32>
    %19 = arith.divf %17, %18 : vector<1x32xf32>
    %cst_13 = arith.constant 9.99999974E-6 : f32
    %20 = vector.broadcast %cst_13 : f32 to vector<1x32xf32>
    %21 = arith.addf %19, %20 : vector<1x32xf32>
    %22 = math.rsqrt %21 : vector<1x32xf32>
    %23 = vector.broadcast %22 : vector<1x32xf32> to vector<112x32xf32>
    %24 = arith.mulf %14, %23 : vector<112x32xf32>
    %25 = vector.broadcast %7 : vector<1x32xf32> to vector<112x32xf32>
    %26 = arith.mulf %24, %25 : vector<112x32xf32>
    %27 = vector.broadcast %8 : vector<1x32xf32> to vector<112x32xf32>
    %28 = arith.addf %26, %27 : vector<112x32xf32>
    %cst_14 = arith.constant 0.00999999977 : f32
    %29 = vector.broadcast %cst_14 : f32 to vector<112x32xf32>
    %30 = arith.mulf %29, %28 : vector<112x32xf32>
    %31 = arith.maximumf %28, %30 : vector<112x32xf32>
    %32 = vector.extract_strided_slice %5 {offsets = [0, 32], sizes = [112, 32], strides = [1, 1]} : vector<112x64xf32> to vector<112x32xf32>
    %c0_15 = arith.constant 0 : index
    %c0_16 = arith.constant 0 : index
    %33 = vector.load %arg20[%c0_15, %c0_16] : memref<32x32xbf16, #tpu.memory_space<vmem>>, vector<32x32xbf16>
    %34 = arith.truncf %31 : vector<112x32xf32> to vector<112x32xbf16>
    %cst_17 = arith.constant dense<0.000000e+00> : vector<112x32xf32>
    %35 = tpu.matmul %34, %33, %cst_17 {dimension_numbers = #tpu.dot_dimension_numbers<[1], [0], [0], [1], [0, 0, 1, 1], [], []>} : vector<112x32xbf16>, vector<32x32xbf16>, vector<112x32xf32> -> vector<112x32xf32>
    %c0_18 = arith.constant 0 : index
    %c0_19 = arith.constant 0 : index
    %36 = vector.load %arg21[%c0_18, %c0_19] : memref<1x32xf32, #tpu.memory_space<vmem>>, vector<1x32xf32>
    %37 = vector.broadcast %36 : vector<1x32xf32> to vector<112x32xf32>
    %38 = arith.addf %35, %37 : vector<112x32xf32>
    %c0_20 = arith.constant 0 : index
    %c0_21 = arith.constant 0 : index
    %39 = vector.load %arg22[%c0_20, %c0_21] : memref<1x32xf32, #tpu.memory_space<vmem>>, vector<1x32xf32>
    %c0_22 = arith.constant 0 : index
    %c0_23 = arith.constant 0 : index
    %40 = vector.load %arg23[%c0_22, %c0_23] : memref<1x32xf32, #tpu.memory_space<vmem>>, vector<1x32xf32>
    %cst_24 = arith.constant dense<0.000000e+00> : vector<32xf32>
    %41 = vector.multi_reduction <add>, %38, %cst_24 [0] : vector<112x32xf32> to vector<32xf32>
    %42 = vector.shape_cast %41 : vector<32xf32> to vector<1x32xf32>
    %cst_25 = arith.constant 1.120000e+02 : f32
    %43 = vector.broadcast %cst_25 : f32 to vector<1x32xf32>
    %44 = arith.divf %42, %43 : vector<1x32xf32>
    %45 = vector.broadcast %44 : vector<1x32xf32> to vector<112x32xf32>
    %46 = arith.subf %38, %45 : vector<112x32xf32>
    %47 = arith.mulf %46, %46 : vector<112x32xf32>
    %cst_26 = arith.constant dense<0.000000e+00> : vector<32xf32>
    %48 = vector.multi_reduction <add>, %47, %cst_26 [0] : vector<112x32xf32> to vector<32xf32>
    %49 = vector.shape_cast %48 : vector<32xf32> to vector<1x32xf32>
    %cst_27 = arith.constant 1.120000e+02 : f32
    %50 = vector.broadcast %cst_27 : f32 to vector<1x32xf32>
    %51 = arith.divf %49, %50 : vector<1x32xf32>
    %cst_28 = arith.constant 9.99999974E-6 : f32
    %52 = vector.broadcast %cst_28 : f32 to vector<1x32xf32>
    %53 = arith.addf %51, %52 : vector<1x32xf32>
    %54 = math.rsqrt %53 : vector<1x32xf32>
    %55 = vector.broadcast %54 : vector<1x32xf32> to vector<112x32xf32>
    %56 = arith.mulf %46, %55 : vector<112x32xf32>
    %57 = vector.broadcast %39 : vector<1x32xf32> to vector<112x32xf32>
    %58 = arith.mulf %56, %57 : vector<112x32xf32>
    %59 = vector.broadcast %40 : vector<1x32xf32> to vector<112x32xf32>
    %60 = arith.addf %58, %59 : vector<112x32xf32>
    %cst_29 = arith.constant 0.00999999977 : f32
    %61 = vector.broadcast %cst_29 : f32 to vector<112x32xf32>
    %62 = arith.mulf %61, %60 : vector<112x32xf32>
    %63 = arith.maximumf %60, %62 : vector<112x32xf32>
    %c0_30 = arith.constant 0 : index
    %c0_31 = arith.constant 0 : index
    %64 = vector.load %arg2[%c0_30, %c0_31] : memref<112x1xf32, #tpu.memory_space<vmem>>, vector<112x1xf32>
    %65 = vector.broadcast %64 : vector<112x1xf32> to vector<112x32xf32>
    %66 = arith.mulf %63, %65 : vector<112x32xf32>
    %67 = arith.addf %66, %32 : vector<112x32xf32>
    %cst_32 = arith.constant 0.00999999977 : f32
    %68 = vector.broadcast %cst_32 : f32 to vector<112x32xf32>
    %69 = arith.mulf %68, %67 : vector<112x32xf32>
    %70 = arith.maximumf %67, %69 : vector<112x32xf32>
    %71 = vector.shape_cast %70 : vector<112x32xf32> to vector<2x56x32xf32>
    %72 = arith.truncf %71 : vector<2x56x32xf32> to vector<2x56x32xbf16>
    %c0_33 = arith.constant 0 : index
    %c0_34 = arith.constant 0 : index
    %c0_35 = arith.constant 0 : index
    %73 = vector.load %arg4[%c0_33, %c0_34, %c0_35] : memref<2x8x56xbf16, #tpu.memory_space<vmem>>, vector<2x8x56xbf16>
    %cst_36 = arith.constant dense<0.000000e+00> : vector<2x8x32xf32>
    %74 = tpu.matmul %73, %72, %cst_36 {dimension_numbers = #tpu.dot_dimension_numbers<[2], [1], [1], [2], [0, 0, 0, 1, 1, 2], [0], [0]>} : vector<2x8x56xbf16>, vector<2x56x32xbf16>, vector<2x8x32xf32> -> vector<2x8x32xf32>
    %c0_37 = arith.constant 0 : index
    %c0_38 = arith.constant 0 : index
    %75 = vector.load %arg1[%c0_37, %c0_38] : memref<16x8xbf16, #tpu.memory_space<vmem>>, vector<16x8xbf16>
    %c0_39 = arith.constant 0 : index
    %c0_40 = arith.constant 0 : index
    %76 = vector.load %arg24[%c0_39, %c0_40] : memref<8x32xbf16, #tpu.memory_space<vmem>>, vector<8x32xbf16>
    %cst_41 = arith.constant dense<0.000000e+00> : vector<16x32xf32>
    %77 = tpu.matmul %75, %76, %cst_41 {dimension_numbers = #tpu.dot_dimension_numbers<[1], [0], [0], [1], [0, 0, 1, 1], [], []>} : vector<16x8xbf16>, vector<8x32xbf16>, vector<16x32xf32> -> vector<16x32xf32>
    %c0_42 = arith.constant 0 : index
    %c0_43 = arith.constant 0 : index
    %78 = vector.load %arg25[%c0_42, %c0_43] : memref<1x32xf32, #tpu.memory_space<vmem>>, vector<1x32xf32>
    %79 = vector.broadcast %78 : vector<1x32xf32> to vector<16x32xf32>
    %80 = arith.addf %77, %79 : vector<16x32xf32>
    %c0_44 = arith.constant 0 : index
    %c0_45 = arith.constant 0 : index
    %81 = vector.load %arg26[%c0_44, %c0_45] : memref<1x32xf32, #tpu.memory_space<vmem>>, vector<1x32xf32>
    %c0_46 = arith.constant 0 : index
    %c0_47 = arith.constant 0 : index
    %82 = vector.load %arg27[%c0_46, %c0_47] : memref<1x32xf32, #tpu.memory_space<vmem>>, vector<1x32xf32>
    %cst_48 = arith.constant dense<0.000000e+00> : vector<32xf32>
    %83 = vector.multi_reduction <add>, %80, %cst_48 [0] : vector<16x32xf32> to vector<32xf32>
    %84 = vector.shape_cast %83 : vector<32xf32> to vector<1x32xf32>
    %cst_49 = arith.constant 1.600000e+01 : f32
    %85 = vector.broadcast %cst_49 : f32 to vector<1x32xf32>
    %86 = arith.divf %84, %85 : vector<1x32xf32>
    %87 = vector.broadcast %86 : vector<1x32xf32> to vector<16x32xf32>
    %88 = arith.subf %80, %87 : vector<16x32xf32>
    %89 = arith.mulf %88, %88 : vector<16x32xf32>
    %cst_50 = arith.constant dense<0.000000e+00> : vector<32xf32>
    %90 = vector.multi_reduction <add>, %89, %cst_50 [0] : vector<16x32xf32> to vector<32xf32>
    %91 = vector.shape_cast %90 : vector<32xf32> to vector<1x32xf32>
    %cst_51 = arith.constant 1.600000e+01 : f32
    %92 = vector.broadcast %cst_51 : f32 to vector<1x32xf32>
    %93 = arith.divf %91, %92 : vector<1x32xf32>
    %cst_52 = arith.constant 9.99999974E-6 : f32
    %94 = vector.broadcast %cst_52 : f32 to vector<1x32xf32>
    %95 = arith.addf %93, %94 : vector<1x32xf32>
    %96 = math.rsqrt %95 : vector<1x32xf32>
    %97 = vector.broadcast %96 : vector<1x32xf32> to vector<16x32xf32>
    %98 = arith.mulf %88, %97 : vector<16x32xf32>
    %99 = vector.broadcast %81 : vector<1x32xf32> to vector<16x32xf32>
    %100 = arith.mulf %98, %99 : vector<16x32xf32>
    %101 = vector.broadcast %82 : vector<1x32xf32> to vector<16x32xf32>
    %102 = arith.addf %100, %101 : vector<16x32xf32>
    %cst_53 = arith.constant 0.00999999977 : f32
    %103 = vector.broadcast %cst_53 : f32 to vector<16x32xf32>
    %104 = arith.mulf %103, %102 : vector<16x32xf32>
    %105 = arith.maximumf %102, %104 : vector<16x32xf32>
    %c0_54 = arith.constant 0 : index
    %c0_55 = arith.constant 0 : index
    %106 = vector.load %arg28[%c0_54, %c0_55] : memref<32x32xbf16, #tpu.memory_space<vmem>>, vector<32x32xbf16>
    %107 = arith.truncf %105 : vector<16x32xf32> to vector<16x32xbf16>
    %cst_56 = arith.constant dense<0.000000e+00> : vector<16x32xf32>
    %108 = tpu.matmul %107, %106, %cst_56 {dimension_numbers = #tpu.dot_dimension_numbers<[1], [0], [0], [1], [0, 0, 1, 1], [], []>} : vector<16x32xbf16>, vector<32x32xbf16>, vector<16x32xf32> -> vector<16x32xf32>
    %c0_57 = arith.constant 0 : index
    %c0_58 = arith.constant 0 : index
    %109 = vector.load %arg29[%c0_57, %c0_58] : memref<1x32xf32, #tpu.memory_space<vmem>>, vector<1x32xf32>
    %110 = vector.broadcast %109 : vector<1x32xf32> to vector<16x32xf32>
    %111 = arith.addf %108, %110 : vector<16x32xf32>
    %c0_59 = arith.constant 0 : index
    %c0_60 = arith.constant 0 : index
    %112 = vector.load %arg30[%c0_59, %c0_60] : memref<1x32xf32, #tpu.memory_space<vmem>>, vector<1x32xf32>
    %c0_61 = arith.constant 0 : index
    %c0_62 = arith.constant 0 : index
    %113 = vector.load %arg31[%c0_61, %c0_62] : memref<1x32xf32, #tpu.memory_space<vmem>>, vector<1x32xf32>
    %cst_63 = arith.constant dense<0.000000e+00> : vector<32xf32>
    %114 = vector.multi_reduction <add>, %111, %cst_63 [0] : vector<16x32xf32> to vector<32xf32>
    %115 = vector.shape_cast %114 : vector<32xf32> to vector<1x32xf32>
    %cst_64 = arith.constant 1.600000e+01 : f32
    %116 = vector.broadcast %cst_64 : f32 to vector<1x32xf32>
    %117 = arith.divf %115, %116 : vector<1x32xf32>
    %118 = vector.broadcast %117 : vector<1x32xf32> to vector<16x32xf32>
    %119 = arith.subf %111, %118 : vector<16x32xf32>
    %120 = arith.mulf %119, %119 : vector<16x32xf32>
    %cst_65 = arith.constant dense<0.000000e+00> : vector<32xf32>
    %121 = vector.multi_reduction <add>, %120, %cst_65 [0] : vector<16x32xf32> to vector<32xf32>
    %122 = vector.shape_cast %121 : vector<32xf32> to vector<1x32xf32>
    %cst_66 = arith.constant 1.600000e+01 : f32
    %123 = vector.broadcast %cst_66 : f32 to vector<1x32xf32>
    %124 = arith.divf %122, %123 : vector<1x32xf32>
    %cst_67 = arith.constant 9.99999974E-6 : f32
    %125 = vector.broadcast %cst_67 : f32 to vector<1x32xf32>
    %126 = arith.addf %124, %125 : vector<1x32xf32>
    %127 = math.rsqrt %126 : vector<1x32xf32>
    %128 = vector.broadcast %127 : vector<1x32xf32> to vector<16x32xf32>
    %129 = arith.mulf %119, %128 : vector<16x32xf32>
    %130 = vector.broadcast %112 : vector<1x32xf32> to vector<16x32xf32>
    %131 = arith.mulf %129, %130 : vector<16x32xf32>
    %132 = vector.broadcast %113 : vector<1x32xf32> to vector<16x32xf32>
    %133 = arith.addf %131, %132 : vector<16x32xf32>
    %cst_68 = arith.constant 0.00999999977 : f32
    %134 = vector.broadcast %cst_68 : f32 to vector<16x32xf32>
    %135 = arith.mulf %134, %133 : vector<16x32xf32>
    %136 = arith.maximumf %133, %135 : vector<16x32xf32>
    %c0_69 = arith.constant 0 : index
    %c0_70 = arith.constant 0 : index
    %137 = vector.load %arg3[%c0_69, %c0_70] : memref<16x1xf32, #tpu.memory_space<vmem>>, vector<16x1xf32>
    %138 = vector.broadcast %137 : vector<16x1xf32> to vector<16x32xf32>
    %139 = arith.mulf %136, %138 : vector<16x32xf32>
    %140 = vector.shape_cast %139 : vector<16x32xf32> to vector<2x8x32xf32>
    %141 = arith.truncf %140 : vector<2x8x32xf32> to vector<2x8x32xbf16>
    %c0_71 = arith.constant 0 : index
    %c0_72 = arith.constant 0 : index
    %c0_73 = arith.constant 0 : index
    %142 = vector.load %arg5[%c0_71, %c0_72, %c0_73] : memref<2x8x8xbf16, #tpu.memory_space<vmem>>, vector<2x8x8xbf16>
    %cst_74 = arith.constant dense<0.000000e+00> : vector<2x8x32xf32>
    %143 = tpu.matmul %142, %141, %cst_74 {dimension_numbers = #tpu.dot_dimension_numbers<[2], [1], [1], [2], [0, 0, 0, 1, 1, 2], [0], [0]>} : vector<2x8x8xbf16>, vector<2x8x32xbf16>, vector<2x8x32xf32> -> vector<2x8x32xf32>
    %144 = vector.shape_cast %74 : vector<2x8x32xf32> to vector<16x32xf32>
    %145 = vector.shape_cast %143 : vector<2x8x32xf32> to vector<16x32xf32>
    %146 = tpu.concatenate %144, %145 in 1 : vector<16x32xf32>, vector<16x32xf32> -> vector<16x64xf32>
    %c0_75 = arith.constant 0 : index
    %c0_76 = arith.constant 0 : index
    %147 = vector.load %arg32[%c0_75, %c0_76] : memref<64x32xbf16, #tpu.memory_space<vmem>>, vector<64x32xbf16>
    %148 = arith.truncf %146 : vector<16x64xf32> to vector<16x64xbf16>
    %cst_77 = arith.constant dense<0.000000e+00> : vector<16x32xf32>
    %149 = tpu.matmul %148, %147, %cst_77 {dimension_numbers = #tpu.dot_dimension_numbers<[1], [0], [0], [1], [0, 0, 1, 1], [], []>} : vector<16x64xbf16>, vector<64x32xbf16>, vector<16x32xf32> -> vector<16x32xf32>
    %c0_78 = arith.constant 0 : index
    %c0_79 = arith.constant 0 : index
    %150 = vector.load %arg33[%c0_78, %c0_79] : memref<1x32xf32, #tpu.memory_space<vmem>>, vector<1x32xf32>
    %151 = vector.broadcast %150 : vector<1x32xf32> to vector<16x32xf32>
    %152 = arith.addf %149, %151 : vector<16x32xf32>
    %cst_80 = arith.constant 0.00999999977 : f32
    %153 = vector.broadcast %cst_80 : f32 to vector<16x32xf32>
    %154 = arith.mulf %153, %152 : vector<16x32xf32>
    %155 = arith.maximumf %152, %154 : vector<16x32xf32>
    %c0_81 = arith.constant 0 : index
    %c0_82 = arith.constant 0 : index
    %156 = vector.load %arg34[%c0_81, %c0_82] : memref<32x5xbf16, #tpu.memory_space<vmem>>, vector<32x5xbf16>
    %157 = arith.truncf %155 : vector<16x32xf32> to vector<16x32xbf16>
    %cst_83 = arith.constant dense<0.000000e+00> : vector<16x5xf32>
    %158 = tpu.matmul %157, %156, %cst_83 {dimension_numbers = #tpu.dot_dimension_numbers<[1], [0], [0], [1], [0, 0, 1, 1], [], []>} : vector<16x32xbf16>, vector<32x5xbf16>, vector<16x5xf32> -> vector<16x5xf32>
    %c0_84 = arith.constant 0 : index
    %c0_85 = arith.constant 0 : index
    %159 = vector.load %arg35[%c0_84, %c0_85] : memref<1x5xf32, #tpu.memory_space<vmem>>, vector<1x5xf32>
    %160 = vector.broadcast %159 : vector<1x5xf32> to vector<16x5xf32>
    %161 = arith.addf %158, %160 : vector<16x5xf32>
    %162 = vector.extract_strided_slice %161 {offsets = [0, 0], sizes = [16, 1], strides = [1, 1]} : vector<16x5xf32> to vector<16x1xf32>
    %163 = vector.extract_strided_slice %161 {offsets = [0, 1], sizes = [16, 4], strides = [1, 1]} : vector<16x5xf32> to vector<16x4xf32>
    %cst_86 = arith.constant dense<0xFF800000> : vector<16xf32>
    %164 = vector.multi_reduction <maximumf>, %162, %cst_86 [1] : vector<16x1xf32> to vector<16xf32>
    %165 = vector.shape_cast %164 : vector<16xf32> to vector<16x1xf32>
    %166 = arith.subf %162, %165 : vector<16x1xf32>
    %167 = math.exp %166 : vector<16x1xf32>
    %cst_87 = arith.constant dense<0.000000e+00> : vector<16xf32>
    %168 = vector.multi_reduction <add>, %167, %cst_87 [1] : vector<16x1xf32> to vector<16xf32>
    %169 = vector.shape_cast %168 : vector<16xf32> to vector<16x1xf32>
    %170 = arith.divf %167, %169 : vector<16x1xf32>
    %c0_88 = arith.constant 0 : index
    %c0_89 = arith.constant 0 : index
    %171 = vector.load %arg37[%c0_88, %c0_89] : memref<16x1xf32, #tpu.memory_space<vmem>>, vector<16x1xf32>
    tpu.vector_store %arg37[%c0_88, %c0_89], %170 {strides = array<i32>} : memref<16x1xf32, #tpu.memory_space<vmem>>, vector<16x1xf32>,
    %c0_90 = arith.constant 0 : index
    %c0_91 = arith.constant 0 : index
    %172 = vector.load %arg14[%c0_90, %c0_91] : memref<1x4xf32, #tpu.memory_space<vmem>>, vector<1x4xf32>
    %cst_92 = arith.constant dense<0.000000e+00> : vector<16x4xf32>
    %173 = tpu.matmul %170, %172, %cst_92 {dimension_numbers = #tpu.dot_dimension_numbers<[1], [0], [0], [1], [0, 0, 1, 1], [], []>} : vector<16x1xf32>, vector<1x4xf32>, vector<16x4xf32> -> vector<16x4xf32>
    %174 = arith.mulf %163, %173 : vector<16x4xf32>
    %c0_93 = arith.constant 0 : index
    %c0_94 = arith.constant 0 : index
    %175 = vector.load %arg15[%c0_93, %c0_94] : memref<4x4xf32, #tpu.memory_space<vmem>>, vector<4x4xf32>
    %cst_95 = arith.constant dense<0.000000e+00> : vector<16x4xf32>
    %176 = tpu.matmul %174, %175, %cst_95 {dimension_numbers = #tpu.dot_dimension_numbers<[1], [0], [0], [1], [0, 0, 1, 1], [], []>} : vector<16x4xf32>, vector<4x4xf32>, vector<16x4xf32> -> vector<16x4xf32>
    %c0_96 = arith.constant 0 : index
    %c0_97 = arith.constant 0 : index
    %177 = vector.load %arg6[%c0_96, %c0_97] : memref<16x12xf32, #tpu.memory_space<vmem>>, vector<16x12xf32>
    %c0_98 = arith.constant 0 : index
    %c0_99 = arith.constant 0 : index
    %178 = vector.load %arg10[%c0_98, %c0_99] : memref<4x12xf32, #tpu.memory_space<vmem>>, vector<4x12xf32>
    %cst_100 = arith.constant dense<0.000000e+00> : vector<16x12xf32>
    %179 = tpu.matmul %176, %178, %cst_100 {dimension_numbers = #tpu.dot_dimension_numbers<[1], [0], [0], [1], [0, 0, 1, 1], [], []>} : vector<16x4xf32>, vector<4x12xf32>, vector<16x12xf32> -> vector<16x12xf32>
    %180 = arith.addf %177, %179 : vector<16x12xf32>
    %c0_101 = arith.constant 0 : index
    %c0_102 = arith.constant 0 : index
    %181 = vector.load %arg8[%c0_101, %c0_102] : memref<16x12xf32, #tpu.memory_space<vmem>>, vector<16x12xf32>
    %c0_103 = arith.constant 0 : index
    %c0_104 = arith.constant 0 : index
    %182 = vector.load %arg9[%c0_103, %c0_104] : memref<12x12xf32, #tpu.memory_space<vmem>>, vector<12x12xf32>
    %cst_105 = arith.constant dense<0.000000e+00> : vector<16x12xf32>
    %183 = tpu.matmul %181, %182, %cst_105 {dimension_numbers = #tpu.dot_dimension_numbers<[1], [0], [0], [1], [0, 0, 1, 1], [], []>} : vector<16x12xf32>, vector<12x12xf32>, vector<16x12xf32> -> vector<16x12xf32>
    %184 = arith.addf %180, %183 : vector<16x12xf32>
    %c0_106 = arith.constant 0 : index
    %c0_107 = arith.constant 0 : index
    %185 = vector.load %arg36[%c0_106, %c0_107] : memref<16x12xf32, #tpu.memory_space<vmem>>, vector<16x12xf32>
    tpu.vector_store %arg36[%c0_106, %c0_107], %184 {strides = array<i32>} : memref<16x12xf32, #tpu.memory_space<vmem>>, vector<16x12xf32>,
    %c0_108 = arith.constant 0 : index
    %c0_109 = arith.constant 0 : index
    %186 = vector.load %arg7[%c0_108, %c0_109] : memref<16x12xf32, #tpu.memory_space<vmem>>, vector<16x12xf32>
    %c0_110 = arith.constant 0 : index
    %c0_111 = arith.constant 0 : index
    %187 = vector.load %arg11[%c0_110, %c0_111] : memref<12x12xf32, #tpu.memory_space<vmem>>, vector<12x12xf32>
    %cst_112 = arith.constant dense<0.000000e+00> : vector<16x12xf32>
    %188 = tpu.matmul %184, %187, %cst_112 {dimension_numbers = #tpu.dot_dimension_numbers<[1], [0], [0], [1], [0, 0, 1, 1], [], []>} : vector<16x12xf32>, vector<12x12xf32>, vector<16x12xf32> -> vector<16x12xf32>
    %189 = arith.addf %186, %188 : vector<16x12xf32>
    %c0_113 = arith.constant 0 : index
    %c0_114 = arith.constant 0 : index
    %190 = vector.load %arg12[%c0_113, %c0_114] : memref<4x12xf32, #tpu.memory_space<vmem>>, vector<4x12xf32>
    %cst_115 = arith.constant dense<0.000000e+00> : vector<16x12xf32>
    %191 = tpu.matmul %163, %190, %cst_115 {dimension_numbers = #tpu.dot_dimension_numbers<[1], [0], [0], [1], [0, 0, 1, 1], [], []>} : vector<16x4xf32>, vector<4x12xf32>, vector<16x12xf32> -> vector<16x12xf32>
    %c0_116 = arith.constant 0 : index
    %c0_117 = arith.constant 0 : index
    %192 = vector.load %arg13[%c0_116, %c0_117] : memref<12x12xf32, #tpu.memory_space<vmem>>, vector<12x12xf32>
    %cst_118 = arith.constant dense<0.000000e+00> : vector<16x12xf32>
    %193 = tpu.matmul %189, %192, %cst_118 {dimension_numbers = #tpu.dot_dimension_numbers<[1], [0], [0], [1], [0, 0, 1, 1], [], []>} : vector<16x12xf32>, vector<12x12xf32>, vector<16x12xf32> -> vector<16x12xf32>
    %194 = arith.addf %191, %193 : vector<16x12xf32>
    %c0_119 = arith.constant 0 : index
    %c0_120 = arith.constant 0 : index
    %195 = vector.load %arg38[%c0_119, %c0_120] : memref<16x12xf32, #tpu.memory_space<vmem>>, vector<16x12xf32>
    tpu.vector_store %arg38[%c0_119, %c0_120], %194 {strides = array<i32>} : memref<16x12xf32, #tpu.memory_space<vmem>>, vector<16x12xf32>,
    return
  }
}

</mosaic_0001>

<llo_original>
// kernel: tpu_custom_call.1
$region0: #{tpu_custom_call.1}
  #allocation0 [shape = 'u32[]', space=smem, size = 0x4, offset = 0x4, fixed_abs, tag = 'smem constant byte address 0x4 - core index']
  #allocation1 [shape = 'u32[144,128]{1,0:T(1,128)}', space=vmem, size = 0x12000, scoped, tag = 'internal scratch']
  %s0 = inlined_call_operand.smem [shape: u32[39], index: -1, kind: input, shape index: {}]
  %s1 = sld [smem:[%s0]]
  %s2 = scalar_lea.smem %s0, 1
  %s3 = sld [smem:[%s2]]
  %s4 = scalar_lea.smem %s0, 2
  %s5 = sld [smem:[%s4]]
  %s6 = scalar_lea.smem %s0, 3
  %s7 = sld [smem:[%s6]]
  %s8 = scalar_lea.smem %s0, 4
  %s9 = sld [smem:[%s8]]
  %s10 = scalar_lea.smem %s0, 5
  %s11 = sld [smem:[%s10]]
  %s12 = scalar_lea.smem %s0, 6
  %s13 = sld [smem:[%s12]]
  %s14 = scalar_lea.smem %s0, 7
  %s15 = sld [smem:[%s14]]
  %s16 = scalar_lea.smem %s0, 8
  %s17 = sld [smem:[%s16]]
  %s18 = scalar_lea.smem %s0, 9
  %s19 = sld [smem:[%s18]]
  %s20 = scalar_lea.smem %s0, 10
  %s21 = sld [smem:[%s20]]
  %s22 = scalar_lea.smem %s0, 11
  %s23 = sld [smem:[%s22]]
  %s24 = scalar_lea.smem %s0, 12
  %s25 = sld [smem:[%s24]]
  %s26 = scalar_lea.smem %s0, 13
  %s27 = sld [smem:[%s26]]
  %s28 = scalar_lea.smem %s0, 14
  %s29 = sld [smem:[%s28]]
  %s30 = scalar_lea.smem %s0, 15
  %s31 = sld [smem:[%s30]]
  %s32 = scalar_lea.smem %s0, 16
  %s33 = sld [smem:[%s32]]
  %s34 = scalar_lea.smem %s0, 17
  %s35 = sld [smem:[%s34]]
  %s36 = scalar_lea.smem %s0, 18
  %s37 = sld [smem:[%s36]]
  %s38 = scalar_lea.smem %s0, 19
  %s39 = sld [smem:[%s38]]
  %s40 = scalar_lea.smem %s0, 20
  %s41 = sld [smem:[%s40]]
  %s42 = scalar_lea.smem %s0, 21
  %s43 = sld [smem:[%s42]]
  %s44 = scalar_lea.smem %s0, 22
  %s45 = sld [smem:[%s44]]
  %s46 = scalar_lea.smem %s0, 23
  %s47 = sld [smem:[%s46]]
  %s48 = scalar_lea.smem %s0, 24
  %s49 = sld [smem:[%s48]]
  %s50 = scalar_lea.smem %s0, 25
  %s51 = sld [smem:[%s50]]
  %s52 = scalar_lea.smem %s0, 26
  %s53 = sld [smem:[%s52]]
  %s54 = scalar_lea.smem %s0, 27
  %s55 = sld [smem:[%s54]]
  %s56 = scalar_lea.smem %s0, 28
  %s57 = sld [smem:[%s56]]
  %s58 = scalar_lea.smem %s0, 29
  %s59 = sld [smem:[%s58]]
  %s60 = scalar_lea.smem %s0, 30
  %s61 = sld [smem:[%s60]]
  %s62 = scalar_lea.smem %s0, 31
  %s63 = sld [smem:[%s62]]
  %s64 = scalar_lea.smem %s0, 32
  %s65 = sld [smem:[%s64]]
  %s66 = scalar_lea.smem %s0, 33
  %s67 = sld [smem:[%s66]]
  %s68 = scalar_lea.smem %s0, 34
  %s69 = sld [smem:[%s68]]
  %s70 = scalar_lea.smem %s0, 35
  %s71 = sld [smem:[%s70]]
  %s72 = scalar_lea.smem %s0, 36
  %s73 = sld [smem:[%s72]]
  %s74 = scalar_lea.smem %s0, 37
  %s75 = sld [smem:[%s74]]
  %s76 = scalar_lea.smem %s0, 38
  %s77 = sld [smem:[%s76]]
  %78 = xla_tuple %s73, %s75, %s77
  %s79 = sld [smem:[#allocation0]]
  $region170: #{tpu_custom_call.1} parent=0
    _
  %s81 = ssub.s32 1, %s79
  %s82 = scalar_select 0, %s81, %s79
  $region1: #{tpu_custom_call.1} parent=0
    #allocation2 [shape = 'u8[8192]{0}', space=vmem, size = 0x2000, scoped, tag = 'output window, operand 0, single buffered']
    #allocation3 [shape = 's32[1]{0}', space=sflag, size = 0x4, scoped, tag = 'scoped memory for tpu_custom_call.1']
    #allocation4 [shape = 'u8[8192]{0}', space=vmem, size = 0x2000, scoped, tag = 'output window, operand 2, single buffered']
    #allocation5 [shape = 's32[1]{0}', space=sflag, size = 0x4, scoped, tag = 'scoped memory for tpu_custom_call.1']
    %83 = vsyncpa [#allocation3], 0
    %84 = vsyncpa [#allocation5], 0
    // Predicated region
    $region2: #{tpu_custom_call.1} parent=1 // pred_check
      _
    $region3: #{tpu_custom_call.1} parent=1 // pred_check_branch
      %86 = sbr.rel (0) target = $region5
    $region4: #{tpu_custom_call.1} parent=1 // pred_region
      _
    $region5: #{tpu_custom_call.1} parent=1 // pred_fallthru
      _
    // Predicated region
    $region6: #{tpu_custom_call.1} parent=1 // pred_check
      _
    $region7: #{tpu_custom_call.1} parent=1 // pred_check_branch
      %88 = sbr.rel (0) target = $region9
    $region8: #{tpu_custom_call.1} parent=1 // pred_region
      _
    $region9: #{tpu_custom_call.1} parent=1 // pred_fallthru
      _
    // Predicated region
    $region10: #{tpu_custom_call.1} parent=1 // pred_check
      _
    $region11: #{tpu_custom_call.1} parent=1 // pred_check_branch
      %90 = sbr.rel (0) target = $region13
    $region12: #{tpu_custom_call.1} parent=1 // pred_region
      _
    $region13: #{tpu_custom_call.1} parent=1 // pred_fallthru
      _
    // Predicated region
    $region14: #{tpu_custom_call.1} parent=1 // pred_check
      _
    $region15: #{tpu_custom_call.1} parent=1 // pred_check_branch
      %92 = sbr.rel (0) target = $region17
    $region16: #{tpu_custom_call.1} parent=1 // pred_region
      _
    $region17: #{tpu_custom_call.1} parent=1 // pred_fallthru
      _
    // Predicated region
    $region18: #{tpu_custom_call.1} parent=1 // pred_check
      _
    $region19: #{tpu_custom_call.1} parent=1 // pred_check_branch
      %94 = sbr.rel (0) target = $region21
    $region20: #{tpu_custom_call.1} parent=1 // pred_region
      _
    $region21: #{tpu_custom_call.1} parent=1 // pred_fallthru
      _
    // Predicated region
    $region22: #{tpu_custom_call.1} parent=1 // pred_check
      _
    $region23: #{tpu_custom_call.1} parent=1 // pred_check_branch
      %96 = sbr.rel (0) target = $region25
    $region24: #{tpu_custom_call.1} parent=1 // pred_region
      _
    $region25: #{tpu_custom_call.1} parent=1 // pred_fallthru
      _
    // Predicated region
    $region26: #{tpu_custom_call.1} parent=1 // pred_check
      _
    $region27: #{tpu_custom_call.1} parent=1 // pred_check_branch
      %98 = sbr.rel (0) target = $region29
    $region28: #{tpu_custom_call.1} parent=1 // pred_region
      _
    $region29: #{tpu_custom_call.1} parent=1 // pred_fallthru
      _
    // Predicated region
    $region30: #{tpu_custom_call.1} parent=1 // pred_check
      _
    $region31: #{tpu_custom_call.1} parent=1 // pred_check_branch
      %100 = sbr.rel (0) target = $region33
    $region32: #{tpu_custom_call.1} parent=1 // pred_region
      _
    $region33: #{tpu_custom_call.1} parent=1 // pred_fallthru
      _
    // Predicated region
    $region34: #{tpu_custom_call.1} parent=1 // pred_check
      _
    $region35: #{tpu_custom_call.1} parent=1 // pred_check_branch
      %102 = sbr.rel (0) target = $region37
    $region36: #{tpu_custom_call.1} parent=1 // pred_region
      _
    $region37: #{tpu_custom_call.1} parent=1 // pred_fallthru
      _
    // Predicated region
    $region38: #{tpu_custom_call.1} parent=1 // pred_check
      _
    $region39: #{tpu_custom_call.1} parent=1 // pred_check_branch
      %104 = sbr.rel (0) target = $region41
    $region40: #{tpu_custom_call.1} parent=1 // pred_region
      _
    $region41: #{tpu_custom_call.1} parent=1 // pred_fallthru
      _
    // Predicated region
    $region42: #{tpu_custom_call.1} parent=1 // pred_check
      _
    $region43: #{tpu_custom_call.1} parent=1 // pred_check_branch
      %106 = sbr.rel (0) target = $region45
    $region44: #{tpu_custom_call.1} parent=1 // pred_region
      _
    $region45: #{tpu_custom_call.1} parent=1 // pred_fallthru
      _
    // Predicated region
    $region46: #{tpu_custom_call.1} parent=1 // pred_check
      _
    $region47: #{tpu_custom_call.1} parent=1 // pred_check_branch
      %108 = sbr.rel (0) target = $region49
    $region48: #{tpu_custom_call.1} parent=1 // pred_region
      _
    $region49: #{tpu_custom_call.1} parent=1 // pred_fallthru
      _
    // Predicated region
    $region50: #{tpu_custom_call.1} parent=1 // pred_check
      _
    $region51: #{tpu_custom_call.1} parent=1 // pred_check_branch
      %110 = sbr.rel (0) target = $region53
    $region52: #{tpu_custom_call.1} parent=1 // pred_region
      _
    $region53: #{tpu_custom_call.1} parent=1 // pred_fallthru
      _
    // Predicated region
    $region54: #{tpu_custom_call.1} parent=1 // pred_check
      _
    $region55: #{tpu_custom_call.1} parent=1 // pred_check_branch
      %112 = sbr.rel (0) target = $region57
    $region56: #{tpu_custom_call.1} parent=1 // pred_region
      _
    $region57: #{tpu_custom_call.1} parent=1 // pred_fallthru
      _
    // Predicated region
    $region58: #{tpu_custom_call.1} parent=1 // pred_check
      _
    $region59: #{tpu_custom_call.1} parent=1 // pred_check_branch
      %114 = sbr.rel (0) target = $region61
    $region60: #{tpu_custom_call.1} parent=1 // pred_region
      _
    $region61: #{tpu_custom_call.1} parent=1 // pred_fallthru
      _
    // Predicated region
    $region62: #{tpu_custom_call.1} parent=1 // pred_check
      _
    $region63: #{tpu_custom_call.1} parent=1 // pred_check_branch
      %116 = sbr.rel (0) target = $region65
    $region64: #{tpu_custom_call.1} parent=1 // pred_region
      _
    $region65: #{tpu_custom_call.1} parent=1 // pred_fallthru
      _
    // Predicated region
    $region66: #{tpu_custom_call.1} parent=1 // pred_check
      _
    $region67: #{tpu_custom_call.1} parent=1 // pred_check_branch
      %118 = sbr.rel (0) target = $region69
    $region68: #{tpu_custom_call.1} parent=1 // pred_region
      _
    $region69: #{tpu_custom_call.1} parent=1 // pred_fallthru
      _
    // Predicated region
    $region70: #{tpu_custom_call.1} parent=1 // pred_check
      _
    $region71: #{tpu_custom_call.1} parent=1 // pred_check_branch
      %120 = sbr.rel (0) target = $region73
    $region72: #{tpu_custom_call.1} parent=1 // pred_region
      _
    $region73: #{tpu_custom_call.1} parent=1 // pred_fallthru
      _
    // Predicated region
    $region74: #{tpu_custom_call.1} parent=1 // pred_check
      _
    $region75: #{tpu_custom_call.1} parent=1 // pred_check_branch
      %122 = sbr.rel (0) target = $region77
    $region76: #{tpu_custom_call.1} parent=1 // pred_region
      _
    $region77: #{tpu_custom_call.1} parent=1 // pred_fallthru
      _
    // Predicated region
    $region78: #{tpu_custom_call.1} parent=1 // pred_check
      _
    $region79: #{tpu_custom_call.1} parent=1 // pred_check_branch
      %124 = sbr.rel (0) target = $region81
    $region80: #{tpu_custom_call.1} parent=1 // pred_region
      _
    $region81: #{tpu_custom_call.1} parent=1 // pred_fallthru
      _
    // Predicated region
    $region82: #{tpu_custom_call.1} parent=1 // pred_check
      _
    $region83: #{tpu_custom_call.1} parent=1 // pred_check_branch
      %126 = sbr.rel (0) target = $region85
    $region84: #{tpu_custom_call.1} parent=1 // pred_region
      _
    $region85: #{tpu_custom_call.1} parent=1 // pred_fallthru
      _
    // Predicated region
    $region86: #{tpu_custom_call.1} parent=1 // pred_check
      _
    $region87: #{tpu_custom_call.1} parent=1 // pred_check_branch
      %128 = sbr.rel (0) target = $region89
    $region88: #{tpu_custom_call.1} parent=1 // pred_region
      _
    $region89: #{tpu_custom_call.1} parent=1 // pred_fallthru
      _
    // Predicated region
    $region90: #{tpu_custom_call.1} parent=1 // pred_check
      _
    $region91: #{tpu_custom_call.1} parent=1 // pred_check_branch
      %130 = sbr.rel (0) target = $region93
    $region92: #{tpu_custom_call.1} parent=1 // pred_region
      _
    $region93: #{tpu_custom_call.1} parent=1 // pred_fallthru
      _
    // Predicated region
    $region94: #{tpu_custom_call.1} parent=1 // pred_check
      _
    $region95: #{tpu_custom_call.1} parent=1 // pred_check_branch
      %132 = sbr.rel (0) target = $region97
    $region96: #{tpu_custom_call.1} parent=1 // pred_region
      _
    $region97: #{tpu_custom_call.1} parent=1 // pred_fallthru
      _
    // Predicated region
    $region98: #{tpu_custom_call.1} parent=1 // pred_check
      _
    $region99: #{tpu_custom_call.1} parent=1 // pred_check_branch
      %134 = sbr.rel (0) target = $region101
    $region100: #{tpu_custom_call.1} parent=1 // pred_region
      _
    $region101: #{tpu_custom_call.1} parent=1 // pred_fallthru
      _
    // Predicated region
    $region102: #{tpu_custom_call.1} parent=1 // pred_check
      _
    $region103: #{tpu_custom_call.1} parent=1 // pred_check_branch
      %136 = sbr.rel (0) target = $region105
    $region104: #{tpu_custom_call.1} parent=1 // pred_region
      _
    $region105: #{tpu_custom_call.1} parent=1 // pred_fallthru
      _
    // Predicated region
    $region106: #{tpu_custom_call.1} parent=1 // pred_check
      _
    $region107: #{tpu_custom_call.1} parent=1 // pred_check_branch
      %138 = sbr.rel (0) target = $region109
    $region108: #{tpu_custom_call.1} parent=1 // pred_region
      _
    $region109: #{tpu_custom_call.1} parent=1 // pred_fallthru
      _
    // Predicated region
    $region110: #{tpu_custom_call.1} parent=1 // pred_check
      _
    $region111: #{tpu_custom_call.1} parent=1 // pred_check_branch
      %140 = sbr.rel (0) target = $region113
    $region112: #{tpu_custom_call.1} parent=1 // pred_region
      _
    $region113: #{tpu_custom_call.1} parent=1 // pred_fallthru
      _
    // Predicated region
    $region114: #{tpu_custom_call.1} parent=1 // pred_check
      _
    $region115: #{tpu_custom_call.1} parent=1 // pred_check_branch
      %142 = sbr.rel (0) target = $region117
    $region116: #{tpu_custom_call.1} parent=1 // pred_region
      _
    $region117: #{tpu_custom_call.1} parent=1 // pred_fallthru
      _
    // Predicated region
    $region118: #{tpu_custom_call.1} parent=1 // pred_check
      _
    $region119: #{tpu_custom_call.1} parent=1 // pred_check_branch
      %144 = sbr.rel (0) target = $region121
    $region120: #{tpu_custom_call.1} parent=1 // pred_region
      _
    $region121: #{tpu_custom_call.1} parent=1 // pred_fallthru
      _
    // Predicated region
    $region122: #{tpu_custom_call.1} parent=1 // pred_check
      _
    $region123: #{tpu_custom_call.1} parent=1 // pred_check_branch
      %146 = sbr.rel (0) target = $region125
    $region124: #{tpu_custom_call.1} parent=1 // pred_region
      _
    $region125: #{tpu_custom_call.1} parent=1 // pred_fallthru
      _
    // Predicated region
    $region126: #{tpu_custom_call.1} parent=1 // pred_check
      _
    $region127: #{tpu_custom_call.1} parent=1 // pred_check_branch
      %148 = sbr.rel (0) target = $region129
    $region128: #{tpu_custom_call.1} parent=1 // pred_region
      _
    $region129: #{tpu_custom_call.1} parent=1 // pred_fallthru
      _
    // Predicated region
    $region130: #{tpu_custom_call.1} parent=1 // pred_check
      _
    $region131: #{tpu_custom_call.1} parent=1 // pred_check_branch
      %150 = sbr.rel (0) target = $region133
    $region132: #{tpu_custom_call.1} parent=1 // pred_region
      _
    $region133: #{tpu_custom_call.1} parent=1 // pred_fallthru
      _
    // Predicated region
    $region134: #{tpu_custom_call.1} parent=1 // pred_check
      _
    $region135: #{tpu_custom_call.1} parent=1 // pred_check_branch
      %152 = sbr.rel (0) target = $region137
    $region136: #{tpu_custom_call.1} parent=1 // pred_region
      _
    $region137: #{tpu_custom_call.1} parent=1 // pred_fallthru
      _
    // Predicated region
    $region138: #{tpu_custom_call.1} parent=1 // pred_check
      _
    $region139: #{tpu_custom_call.1} parent=1 // pred_check_branch
      %154 = sbr.rel (0) target = $region141
    $region140: #{tpu_custom_call.1} parent=1 // pred_region
      _
    $region141: #{tpu_custom_call.1} parent=1 // pred_fallthru
      _
    // Predicated region
    $region142: #{tpu_custom_call.1} parent=1 // pred_check
      _
    $region143: #{tpu_custom_call.1} parent=1 // pred_check_branch
      %156 = sbr.rel (0) target = $region145
    $region144: #{tpu_custom_call.1} parent=1 // pred_region
      _
    $region145: #{tpu_custom_call.1} parent=1 // pred_fallthru
      _
    %v158 = vld [vmem:[%s1] sm:$0xf]
    %v159 = vld [vmem:[%s1 + $0x4] sm:$0xf]
    %v160 = vld [vmem:[%s1 + $0x8] sm:$0xf]
    %v161 = vld [vmem:[%s1 + $0xc] sm:$0xf]
    %v162 = vld [vmem:[%s1 + $0x10] sm:$0xf]
    %v163 = vld [vmem:[%s1 + $0x14] sm:$0xf]
    %v164 = vld [vmem:[%s1 + $0x18] sm:$0xf]
    %v165 = vld [vmem:[%s1 + $0x1c] sm:$0xf]
    %v166 = vld [vmem:[%s1 + $0x20] sm:$0xf]
    %v167 = vld [vmem:[%s1 + $0x24] sm:$0xf]
    %v168 = vld [vmem:[%s1 + $0x28] sm:$0xf]
    %v169 = vld [vmem:[%s1 + $0x2c] sm:$0xf]
    %v170 = vld [vmem:[%s1 + $0x30] sm:$0xf]
    %v171 = vld [vmem:[%s1 + $0x34] sm:$0xf]
    %v172 = vld [vmem:[%s33] sm:$0xf]
    %v173 = vld [vmem:[%s33 + $0x4] sm:$0xf]
    %v174 = vld [vmem:[%s35] sm:$0x1]
    %v176 = vlaneseq
    %v177 = vshrl.u32 %v176, 7
    %v178 = vsub.s32 0, %v177
    %v179 = vrot.slane %v174, %v178
    %v195 = vunpack.c.l.b16 %v158
    %v196 = vunpack.c.l.b16 %v159
    %v197 = vunpack.c.l.b16 %v160
    %v198 = vunpack.c.l.b16 %v161
    %v199 = vunpack.c.l.b16 %v162
    %v200 = vunpack.c.l.b16 %v163
    %v201 = vunpack.c.l.b16 %v164
    %v202 = vunpack.c.l.b16 %v165
    %v203 = vunpack.c.l.b16 %v166
    %v204 = vunpack.c.l.b16 %v167
    %v205 = vunpack.c.l.b16 %v168
    %v206 = vunpack.c.l.b16 %v169
    %v207 = vunpack.c.l.b16 %v170
    %v208 = vunpack.c.l.b16 %v171
    %v209 = vpack.c.b16 %v196, %v195
    %v210 = vpack.c.b16 %v198, %v197
    %v211 = vpack.c.b16 %v200, %v199
    %v212 = vpack.c.b16 %v202, %v201
    %v213 = vpack.c.b16 %v204, %v203
    %v214 = vpack.c.b16 %v206, %v205
    %v215 = vpack.c.b16 %v208, %v207
    %v218 = vunpack.c.l.b16 %v172
    %v219 = vunpack.c.l.b16 %v173
    %v220 = vpack.c.b16 %v219, %v218
    %vm222 = vcmask 130048
    %v224 = vsel %vm222, %v209, 0
    %v227 = vsel %vm222, %v210, 0
    %v230 = vsel %vm222, %v211, 0
    %v233 = vsel %vm222, %v212, 0
    %v236 = vsel %vm222, %v213, 0
    %v239 = vsel %vm222, %v214, 0
    %v242 = vsel %vm222, %v215, 0
    %244 = vmatprep.subr.bf16.mxu0 0
    %245 = vmatpush1.bf16.msra.mxu0 %v220
    %246 = vmatprep.subr.bf16.mxu0 0
    %247 = vmatpush1.bf16.msra.mxu0 0
    %248 = vmatprep.subr.bf16.mxu0 0
    %249 = vmatpush1.bf16.msra.mxu0 0
    %250 = vmatprep.subr.bf16.mxu0 0
    %251 = vmatpush1.bf16.msra.mxu0 0
    %252 = vmatprep.subr.bf16.mxu0 0
    %253 = vmatpush1.bf16.msra.mxu0 0
    %254 = vmatprep.subr.bf16.mxu0 0
    %255 = vmatpush1.bf16.msra.mxu0 0
    %256 = vmatprep.subr.bf16.mxu0 0
    %257 = vmatpush1.bf16.msra.mxu0 0
    %258 = vmatprep.subr.bf16.mxu0 0
    %259 = vmatpush1.bf16.msra.mxu0 0
    %260 = vmatprep.subr.bf16.mxu0 0
    %261 = vmatpush1.bf16.msra.mxu0 0
    %262 = vmatprep.subr.bf16.mxu0 0
    %263 = vmatpush1.bf16.msra.mxu0 0
    %264 = vmatprep.subr.bf16.mxu0 0
    %265 = vmatpush1.bf16.msra.mxu0 0
    %266 = vmatprep.subr.bf16.mxu0 0
    %267 = vmatpush1.bf16.msra.mxu0 0
    %268 = vmatprep.subr.bf16.mxu0 0
    %269 = vmatpush1.bf16.msra.mxu0 0
    %270 = vmatprep.subr.bf16.mxu0 0
    %271 = vmatpush1.bf16.msra.mxu0 0
    %272 = vmatprep.subr.bf16.mxu0 0
    %273 = vmatpush1.bf16.msra.mxu0 0
    %274 = vmatprep.subr.bf16.mxu0 0
    %275 = vmatpush1.bf16.msra.mxu0 0
    %276 = vmatprep.mubr.bf16.mxu0 0
    %277 = vmatmul.mubr.bf16.gmra.mrb[0].mxu0 %v224
    %v278 = vpop.f32.mrb[0].mxu0
    %v279 = vadd.f32 %v179, %v278
    %v280 = vpop.f32.mrb[0].mxu0
    %v281 = vpop.f32.mrb[0].mxu0
    %v282 = vadd.f32 %v179, %v281
    %v283 = vpop.f32.mrb[0].mxu0
    %284 = vmatprep.mubr.bf16.mxu0 0
    %285 = vmatmul.mubr.bf16.gmra.mrb[0].mxu0 %v227
    %v286 = vpop.f32.mrb[0].mxu0
    %v287 = vadd.f32 %v179, %v286
    %v288 = vpop.f32.mrb[0].mxu0
    %v289 = vpop.f32.mrb[0].mxu0
    %v290 = vadd.f32 %v179, %v289
    %v291 = vpop.f32.mrb[0].mxu0
    %292 = vmatprep.mubr.bf16.mxu0 0
    %293 = vmatmul.mubr.bf16.gmra.mrb[0].mxu0 %v230
    %v294 = vpop.f32.mrb[0].mxu0
    %v295 = vadd.f32 %v179, %v294
    %v296 = vpop.f32.mrb[0].mxu0
    %v297 = vpop.f32.mrb[0].mxu0
    %v298 = vadd.f32 %v179, %v297
    %v299 = vpop.f32.mrb[0].mxu0
    %300 = vmatprep.mubr.bf16.mxu0 0
    %301 = vmatmul.mubr.bf16.gmra.mrb[0].mxu0 %v233
    %v302 = vpop.f32.mrb[0].mxu0
    %v303 = vadd.f32 %v179, %v302
    %v304 = vpop.f32.mrb[0].mxu0
    %v305 = vpop.f32.mrb[0].mxu0
    %v306 = vadd.f32 %v179, %v305
    %v307 = vpop.f32.mrb[0].mxu0
    %308 = vmatprep.mubr.bf16.mxu0 0
    %309 = vmatmul.mubr.bf16.gmra.mrb[0].mxu0 %v236
    %v310 = vpop.f32.mrb[0].mxu0
    %v311 = vadd.f32 %v179, %v310
    %v312 = vpop.f32.mrb[0].mxu0
    %v313 = vpop.f32.mrb[0].mxu0
    %v314 = vadd.f32 %v179, %v313
    %v315 = vpop.f32.mrb[0].mxu0
    %316 = vmatprep.mubr.bf16.mxu0 0
    %317 = vmatmul.mubr.bf16.gmra.mrb[0].mxu0 %v239
    %v318 = vpop.f32.mrb[0].mxu0
    %v319 = vadd.f32 %v179, %v318
    %v320 = vpop.f32.mrb[0].mxu0
    %v321 = vpop.f32.mrb[0].mxu0
    %v322 = vadd.f32 %v179, %v321
    %v323 = vpop.f32.mrb[0].mxu0
    %324 = vmatprep.mubr.bf16.mxu0 0
    %325 = vmatmul.mubr.bf16.gmra.mrb[0].mxu0 %v242
    %v326 = vpop.f32.mrb[0].mxu0
    %v327 = vadd.f32 %v179, %v326
    %v328 = vpop.f32.mrb[0].mxu0
    %v329 = vpop.f32.mrb[0].mxu0
    %v330 = vadd.f32 %v179, %v329
    %v331 = vpop.f32.mrb[0].mxu0
    %332 = vdwg.mxu0
    %v333 = vld [vmem:[%s37] sm:$0x1]
    %v334 = vld [vmem:[%s39] sm:$0x1]
    %vm335 = vcmask 261120
    %v336 = vsel %vm335, %v279, 0.0
    %v337 = vsel %vm335, %v282, 0.0
    %v338 = vadd.f32 %v336, %v337
    %v339 = vsel %vm335, %v287, 0.0
    %v340 = vadd.f32 %v338, %v339
    %v341 = vsel %vm335, %v290, 0.0
    %v342 = vadd.f32 %v340, %v341
    %v343 = vsel %vm335, %v295, 0.0
    %v344 = vadd.f32 %v342, %v343
    %v345 = vsel %vm335, %v298, 0.0
    %v346 = vadd.f32 %v344, %v345
    %v347 = vsel %vm335, %v303, 0.0
    %v348 = vadd.f32 %v346, %v347
    %v349 = vsel %vm335, %v306, 0.0
    %v350 = vadd.f32 %v348, %v349
    %v351 = vsel %vm335, %v311, 0.0
    %v352 = vadd.f32 %v350, %v351
    %v353 = vsel %vm335, %v314, 0.0
    %v354 = vadd.f32 %v352, %v353
    %v355 = vsel %vm335, %v319, 0.0
    %v356 = vadd.f32 %v354, %v355
    %v357 = vsel %vm335, %v322, 0.0
    %v358 = vadd.f32 %v356, %v357
    %v359 = vsel %vm335, %v327, 0.0
    %v360 = vadd.f32 %v358, %v359
    %v361 = vsel %vm335, %v330, 0.0
    %v362 = vadd.f32 %v360, %v361
    %v363 = vrot.slane %v362, 4
    %v364 = vadd.f32 %v362, %v363
    %v365 = vrot.slane %v364, 2
    %v366 = vadd.f32 %v364, %v365
    %v367 = vrot.slane %v366, 1
    %v368 = vadd.f32 %v366, %v367
    %v369 = vrcp.pop 112.0
    %v370 = vmul.f32 %v368, %v369
    %v371 = vsub.f32 %v279, %v370
    %v372 = vsub.f32 %v282, %v370
    %v373 = vsub.f32 %v287, %v370
    %v374 = vsub.f32 %v290, %v370
    %v375 = vsub.f32 %v295, %v370
    %v376 = vsub.f32 %v298, %v370
    %v377 = vsub.f32 %v303, %v370
    %v378 = vsub.f32 %v306, %v370
    %v379 = vsub.f32 %v311, %v370
    %v380 = vsub.f32 %v314, %v370
    %v381 = vsub.f32 %v319, %v370
    %v382 = vsub.f32 %v322, %v370
    %v383 = vsub.f32 %v327, %v370
    %v384 = vsub.f32 %v330, %v370
    %v385 = vmul.f32 %v371, %v371
    %v386 = vmul.f32 %v372, %v372
    %v387 = vmul.f32 %v373, %v373
    %v388 = vmul.f32 %v374, %v374
    %v389 = vmul.f32 %v375, %v375
    %v390 = vmul.f32 %v376, %v376
    %v391 = vmul.f32 %v377, %v377
    %v392 = vmul.f32 %v378, %v378
    %v393 = vmul.f32 %v379, %v379
    %v394 = vmul.f32 %v380, %v380
    %v395 = vmul.f32 %v381, %v381
    %v396 = vmul.f32 %v382, %v382
    %v397 = vmul.f32 %v383, %v383
    %v398 = vmul.f32 %v384, %v384
    %v399 = vsel %vm335, %v385, 0.0
    %v400 = vsel %vm335, %v386, 0.0
    %v401 = vadd.f32 %v399, %v400
    %v402 = vsel %vm335, %v387, 0.0
    %v403 = vadd.f32 %v401, %v402
    %v404 = vsel %vm335, %v388, 0.0
    %v405 = vadd.f32 %v403, %v404
    %v406 = vsel %vm335, %v389, 0.0
    %v407 = vadd.f32 %v405, %v406
    %v408 = vsel %vm335, %v390, 0.0
    %v409 = vadd.f32 %v407, %v408
    %v410 = vsel %vm335, %v391, 0.0
    %v411 = vadd.f32 %v409, %v410
    %v412 = vsel %vm335, %v392, 0.0
    %v413 = vadd.f32 %v411, %v412
    %v414 = vsel %vm335, %v393, 0.0
    %v415 = vadd.f32 %v413, %v414
    %v416 = vsel %vm335, %v394, 0.0
    %v417 = vadd.f32 %v415, %v416
    %v418 = vsel %vm335, %v395, 0.0
    %v419 = vadd.f32 %v417, %v418
    %v420 = vsel %vm335, %v396, 0.0
    %v421 = vadd.f32 %v419, %v420
    %v422 = vsel %vm335, %v397, 0.0
    %v423 = vadd.f32 %v421, %v422
    %v424 = vsel %vm335, %v398, 0.0
    %v425 = vadd.f32 %v423, %v424
    %v426 = vrot.slane %v425, 4
    %v427 = vadd.f32 %v425, %v426
    %v428 = vrot.slane %v427, 2
    %v429 = vadd.f32 %v427, %v428
    %v430 = vrot.slane %v429, 1
    %v431 = vadd.f32 %v429, %v430
    %v432 = vmul.f32 %v431, %v369
    %v433 = vadd.f32 %v432, 1e-05
    %v434 = vrsqrt.pop %v433
    %v435 = vmul.f32 %v371, %v434
    %v436 = vmul.f32 %v372, %v434
    %v437 = vmul.f32 %v373, %v434
    %v438 = vmul.f32 %v374, %v434
    %v439 = vmul.f32 %v375, %v434
    %v440 = vmul.f32 %v376, %v434
    %v441 = vmul.f32 %v377, %v434
    %v442 = vmul.f32 %v378, %v434
    %v443 = vmul.f32 %v379, %v434
    %v444 = vmul.f32 %v380, %v434
    %v445 = vmul.f32 %v381, %v434
    %v446 = vmul.f32 %v382, %v434
    %v447 = vmul.f32 %v383, %v434
    %v448 = vmul.f32 %v384, %v434
    %v450 = vlaneseq
    %v451 = vshrl.u32 %v450, 7
    %v452 = vsub.s32 0, %v451
    %v453 = vrot.slane %v333, %v452
    %v455 = vmul.f32 %v435, %v453
    %v456 = vmul.f32 %v436, %v453
    %v457 = vmul.f32 %v437, %v453
    %v458 = vmul.f32 %v438, %v453
    %v459 = vmul.f32 %v439, %v453
    %v460 = vmul.f32 %v440, %v453
    %v461 = vmul.f32 %v441, %v453
    %v462 = vmul.f32 %v442, %v453
    %v463 = vmul.f32 %v443, %v453
    %v464 = vmul.f32 %v444, %v453
    %v465 = vmul.f32 %v445, %v453
    %v466 = vmul.f32 %v446, %v453
    %v467 = vmul.f32 %v447, %v453
    %v468 = vmul.f32 %v448, %v453
    %v470 = vlaneseq
    %v471 = vshrl.u32 %v470, 7
    %v472 = vsub.s32 0, %v471
    %v473 = vrot.slane %v334, %v472
    %v475 = vadd.f32 %v455, %v473
    %v476 = vadd.f32 %v456, %v473
    %v477 = vadd.f32 %v457, %v473
    %v478 = vadd.f32 %v458, %v473
    %v479 = vadd.f32 %v459, %v473
    %v480 = vadd.f32 %v460, %v473
    %v481 = vadd.f32 %v461, %v473
    %v482 = vadd.f32 %v462, %v473
    %v483 = vadd.f32 %v463, %v473
    %v484 = vadd.f32 %v464, %v473
    %v485 = vadd.f32 %v465, %v473
    %v486 = vadd.f32 %v466, %v473
    %v487 = vadd.f32 %v467, %v473
    %v488 = vadd.f32 %v468, %v473
    %v489 = vmul.f32 %v475, 0.01
    %v490 = vmul.f32 %v476, 0.01
    %v491 = vmul.f32 %v477, 0.01
    %v492 = vmul.f32 %v478, 0.01
    %v493 = vmul.f32 %v479, 0.01
    %v494 = vmul.f32 %v480, 0.01
    %v495 = vmul.f32 %v481, 0.01
    %v496 = vmul.f32 %v482, 0.01
    %v497 = vmul.f32 %v483, 0.01
    %v498 = vmul.f32 %v484, 0.01
    %v499 = vmul.f32 %v485, 0.01
    %v500 = vmul.f32 %v486, 0.01
    %v501 = vmul.f32 %v487, 0.01
    %v502 = vmul.f32 %v488, 0.01
    %v503 = vmax.f32 %v475, %v489
    %v504 = vmax.f32 %v476, %v490
    %v505 = vmax.f32 %v477, %v491
    %v506 = vmax.f32 %v478, %v492
    %v507 = vmax.f32 %v479, %v493
    %v508 = vmax.f32 %v480, %v494
    %v509 = vmax.f32 %v481, %v495
    %v510 = vmax.f32 %v482, %v496
    %v511 = vmax.f32 %v483, %v497
    %v512 = vmax.f32 %v484, %v498
    %v513 = vmax.f32 %v485, %v499
    %v514 = vmax.f32 %v486, %v500
    %v515 = vmax.f32 %v487, %v501
    %v516 = vmax.f32 %v488, %v502
    %v517 = vld [vmem:[%s41] sm:$0xf]
    %v518 = vld [vmem:[%s41 + $0x4] sm:$0xf]
    %v519 = vld [vmem:[%s41 + $0x8] sm:$0xf]
    %v520 = vld [vmem:[%s41 + $0xc] sm:$0xf]
    %v521 = vpack.c.bf16 %v504, %v503
    %v522 = vpack.c.bf16 %v506, %v505
    %v523 = vpack.c.bf16 %v508, %v507
    %v524 = vpack.c.bf16 %v510, %v509
    %v525 = vpack.c.bf16 %v512, %v511
    %v526 = vpack.c.bf16 %v514, %v513
    %v527 = vpack.c.bf16 %v516, %v515
    %v528 = vld [vmem:[%s43] sm:$0x1]
    %v530 = vlaneseq
    %v531 = vshrl.u32 %v530, 7
    %v532 = vsub.s32 0, %v531
    %v533 = vrot.slane %v528, %v532
    %v539 = vunpack.c.l.b16 %v517
    %v540 = vunpack.c.l.b16 %v518
    %v541 = vunpack.c.l.b16 %v519
    %v542 = vunpack.c.l.b16 %v520
    %v543 = vpack.c.b16 %v540, %v539
    %v544 = vpack.c.b16 %v542, %v541
    %v548 = vsel %vm335, %v521, 0
    %v551 = vsel %vm335, %v522, 0
    %v554 = vsel %vm335, %v523, 0
    %v557 = vsel %vm335, %v524, 0
    %v560 = vsel %vm335, %v525, 0
    %v563 = vsel %vm335, %v526, 0
    %v566 = vsel %vm335, %v527, 0
    %568 = vmatprep.subr.bf16.mxu0 0
    %569 = vmatpush1.bf16.msra.mxu0 %v543
    %570 = vmatprep.subr.bf16.mxu0 0
    %571 = vmatpush1.bf16.msra.mxu0 %v544
    %572 = vmatprep.subr.bf16.mxu0 0
    %573 = vmatpush1.bf16.msra.mxu0 0
    %574 = vmatprep.subr.bf16.mxu0 0
    %575 = vmatpush1.bf16.msra.mxu0 0
    %576 = vmatprep.subr.bf16.mxu0 0
    %577 = vmatpush1.bf16.msra.mxu0 0
    %578 = vmatprep.subr.bf16.mxu0 0
    %579 = vmatpush1.bf16.msra.mxu0 0
    %580 = vmatprep.subr.bf16.mxu0 0
    %581 = vmatpush1.bf16.msra.mxu0 0
    %582 = vmatprep.subr.bf16.mxu0 0
    %583 = vmatpush1.bf16.msra.mxu0 0
    %584 = vmatprep.subr.bf16.mxu0 0
    %585 = vmatpush1.bf16.msra.mxu0 0
    %586 = vmatprep.subr.bf16.mxu0 0
    %587 = vmatpush1.bf16.msra.mxu0 0
    %588 = vmatprep.subr.bf16.mxu0 0
    %589 = vmatpush1.bf16.msra.mxu0 0
    %590 = vmatprep.subr.bf16.mxu0 0
    %591 = vmatpush1.bf16.msra.mxu0 0
    %592 = vmatprep.subr.bf16.mxu0 0
    %593 = vmatpush1.bf16.msra.mxu0 0
    %594 = vmatprep.subr.bf16.mxu0 0
    %595 = vmatpush1.bf16.msra.mxu0 0
    %596 = vmatprep.subr.bf16.mxu0 0
    %597 = vmatpush1.bf16.msra.mxu0 0
    %598 = vmatprep.subr.bf16.mxu0 0
    %599 = vmatpush1.bf16.msra.mxu0 0
    %600 = vmatprep.mubr.bf16.mxu0 0
    %601 = vmatmul.mubr.bf16.gmra.mrb[0].mxu0 %v548
    %v602 = vpop.f32.mrb[0].mxu0
    %v603 = vadd.f32 %v533, %v602
    %v604 = vpop.f32.mrb[0].mxu0
    %v605 = vpop.f32.mrb[0].mxu0
    %v606 = vadd.f32 %v533, %v605
    %v607 = vpop.f32.mrb[0].mxu0
    %608 = vmatprep.mubr.bf16.mxu0 0
    %609 = vmatmul.mubr.bf16.gmra.mrb[0].mxu0 %v551
    %v610 = vpop.f32.mrb[0].mxu0
    %v611 = vadd.f32 %v533, %v610
    %v612 = vpop.f32.mrb[0].mxu0
    %v613 = vpop.f32.mrb[0].mxu0
    %v614 = vadd.f32 %v533, %v613
    %v615 = vpop.f32.mrb[0].mxu0
    %616 = vmatprep.mubr.bf16.mxu0 0
    %617 = vmatmul.mubr.bf16.gmra.mrb[0].mxu0 %v554
    %v618 = vpop.f32.mrb[0].mxu0
    %v619 = vadd.f32 %v533, %v618
    %v620 = vpop.f32.mrb[0].mxu0
    %v621 = vpop.f32.mrb[0].mxu0
    %v622 = vadd.f32 %v533, %v621
    %v623 = vpop.f32.mrb[0].mxu0
    %624 = vmatprep.mubr.bf16.mxu0 0
    %625 = vmatmul.mubr.bf16.gmra.mrb[0].mxu0 %v557
    %v626 = vpop.f32.mrb[0].mxu0
    %v627 = vadd.f32 %v533, %v626
    %v628 = vpop.f32.mrb[0].mxu0
    %v629 = vpop.f32.mrb[0].mxu0
    %v630 = vadd.f32 %v533, %v629
    %v631 = vpop.f32.mrb[0].mxu0
    %632 = vmatprep.mubr.bf16.mxu0 0
    %633 = vmatmul.mubr.bf16.gmra.mrb[0].mxu0 %v560
    %v634 = vpop.f32.mrb[0].mxu0
    %v635 = vadd.f32 %v533, %v634
    %v636 = vpop.f32.mrb[0].mxu0
    %v637 = vpop.f32.mrb[0].mxu0
    %v638 = vadd.f32 %v533, %v637
    %v639 = vpop.f32.mrb[0].mxu0
    %640 = vmatprep.mubr.bf16.mxu0 0
    %641 = vmatmul.mubr.bf16.gmra.mrb[0].mxu0 %v563
    %v642 = vpop.f32.mrb[0].mxu0
    %v643 = vadd.f32 %v533, %v642
    %v644 = vpop.f32.mrb[0].mxu0
    %v645 = vpop.f32.mrb[0].mxu0
    %v646 = vadd.f32 %v533, %v645
    %v647 = vpop.f32.mrb[0].mxu0
    %648 = vmatprep.mubr.bf16.mxu0 0
    %649 = vmatmul.mubr.bf16.gmra.mrb[0].mxu0 %v566
    %v650 = vpop.f32.mrb[0].mxu0
    %v651 = vadd.f32 %v533, %v650
    %v652 = vpop.f32.mrb[0].mxu0
    %v653 = vpop.f32.mrb[0].mxu0
    %v654 = vadd.f32 %v533, %v653
    %v655 = vpop.f32.mrb[0].mxu0
    %656 = vdwg.mxu0
    %v657 = vld [vmem:[%s45] sm:$0x1]
    %v658 = vld [vmem:[%s47] sm:$0x1]
    %v659 = vsel %vm335, %v603, 0.0
    %v660 = vsel %vm335, %v606, 0.0
    %v661 = vadd.f32 %v659, %v660
    %v662 = vsel %vm335, %v611, 0.0
    %v663 = vadd.f32 %v661, %v662
    %v664 = vsel %vm335, %v614, 0.0
    %v665 = vadd.f32 %v663, %v664
    %v666 = vsel %vm335, %v619, 0.0
    %v667 = vadd.f32 %v665, %v666
    %v668 = vsel %vm335, %v622, 0.0
    %v669 = vadd.f32 %v667, %v668
    %v670 = vsel %vm335, %v627, 0.0
    %v671 = vadd.f32 %v669, %v670
    %v672 = vsel %vm335, %v630, 0.0
    %v673 = vadd.f32 %v671, %v672
    %v674 = vsel %vm335, %v635, 0.0
    %v675 = vadd.f32 %v673, %v674
    %v676 = vsel %vm335, %v638, 0.0
    %v677 = vadd.f32 %v675, %v676
    %v678 = vsel %vm335, %v643, 0.0
    %v679 = vadd.f32 %v677, %v678
    %v680 = vsel %vm335, %v646, 0.0
    %v681 = vadd.f32 %v679, %v680
    %v682 = vsel %vm335, %v651, 0.0
    %v683 = vadd.f32 %v681, %v682
    %v684 = vsel %vm335, %v654, 0.0
    %v685 = vadd.f32 %v683, %v684
    %v686 = vrot.slane %v685, 4
    %v687 = vadd.f32 %v685, %v686
    %v688 = vrot.slane %v687, 2
    %v689 = vadd.f32 %v687, %v688
    %v690 = vrot.slane %v689, 1
    %v691 = vadd.f32 %v689, %v690
    %v692 = vmul.f32 %v691, %v369
    %v693 = vsub.f32 %v603, %v692
    %v694 = vsub.f32 %v606, %v692
    %v695 = vsub.f32 %v611, %v692
    %v696 = vsub.f32 %v614, %v692
    %v697 = vsub.f32 %v619, %v692
    %v698 = vsub.f32 %v622, %v692
    %v699 = vsub.f32 %v627, %v692
    %v700 = vsub.f32 %v630, %v692
    %v701 = vsub.f32 %v635, %v692
    %v702 = vsub.f32 %v638, %v692
    %v703 = vsub.f32 %v643, %v692
    %v704 = vsub.f32 %v646, %v692
    %v705 = vsub.f32 %v651, %v692
    %v706 = vsub.f32 %v654, %v692
    %v707 = vmul.f32 %v693, %v693
    %v708 = vmul.f32 %v694, %v694
    %v709 = vmul.f32 %v695, %v695
    %v710 = vmul.f32 %v696, %v696
    %v711 = vmul.f32 %v697, %v697
    %v712 = vmul.f32 %v698, %v698
    %v713 = vmul.f32 %v699, %v699
    %v714 = vmul.f32 %v700, %v700
    %v715 = vmul.f32 %v701, %v701
    %v716 = vmul.f32 %v702, %v702
    %v717 = vmul.f32 %v703, %v703
    %v718 = vmul.f32 %v704, %v704
    %v719 = vmul.f32 %v705, %v705
    %v720 = vmul.f32 %v706, %v706
    %v721 = vsel %vm335, %v707, 0.0
    %v722 = vsel %vm335, %v708, 0.0
    %v723 = vadd.f32 %v721, %v722
    %v724 = vsel %vm335, %v709, 0.0
    %v725 = vadd.f32 %v723, %v724
    %v726 = vsel %vm335, %v710, 0.0
    %v727 = vadd.f32 %v725, %v726
    %v728 = vsel %vm335, %v711, 0.0
    %v729 = vadd.f32 %v727, %v728
    %v730 = vsel %vm335, %v712, 0.0
    %v731 = vadd.f32 %v729, %v730
    %v732 = vsel %vm335, %v713, 0.0
    %v733 = vadd.f32 %v731, %v732
    %v734 = vsel %vm335, %v714, 0.0
    %v735 = vadd.f32 %v733, %v734
    %v736 = vsel %vm335, %v715, 0.0
    %v737 = vadd.f32 %v735, %v736
    %v738 = vsel %vm335, %v716, 0.0
    %v739 = vadd.f32 %v737, %v738
    %v740 = vsel %vm335, %v717, 0.0
    %v741 = vadd.f32 %v739, %v740
    %v742 = vsel %vm335, %v718, 0.0
    %v743 = vadd.f32 %v741, %v742
    %v744 = vsel %vm335, %v719, 0.0
    %v745 = vadd.f32 %v743, %v744
    %v746 = vsel %vm335, %v720, 0.0
    %v747 = vadd.f32 %v745, %v746
    %v748 = vrot.slane %v747, 4
    %v749 = vadd.f32 %v747, %v748
    %v750 = vrot.slane %v749, 2
    %v751 = vadd.f32 %v749, %v750
    %v752 = vrot.slane %v751, 1
    %v753 = vadd.f32 %v751, %v752
    %v754 = vmul.f32 %v753, %v369
    %v755 = vadd.f32 %v754, 1e-05
    %v756 = vrsqrt.pop %v755
    %v757 = vmul.f32 %v693, %v756
    %v758 = vmul.f32 %v694, %v756
    %v759 = vmul.f32 %v695, %v756
    %v760 = vmul.f32 %v696, %v756
    %v761 = vmul.f32 %v697, %v756
    %v762 = vmul.f32 %v698, %v756
    %v763 = vmul.f32 %v699, %v756
    %v764 = vmul.f32 %v700, %v756
    %v765 = vmul.f32 %v701, %v756
    %v766 = vmul.f32 %v702, %v756
    %v767 = vmul.f32 %v703, %v756
    %v768 = vmul.f32 %v704, %v756
    %v769 = vmul.f32 %v705, %v756
    %v770 = vmul.f32 %v706, %v756
    %v772 = vlaneseq
    %v773 = vshrl.u32 %v772, 7
    %v774 = vsub.s32 0, %v773
    %v775 = vrot.slane %v657, %v774
    %v777 = vmul.f32 %v757, %v775
    %v778 = vmul.f32 %v758, %v775
    %v779 = vmul.f32 %v759, %v775
    %v780 = vmul.f32 %v760, %v775
    %v781 = vmul.f32 %v761, %v775
    %v782 = vmul.f32 %v762, %v775
    %v783 = vmul.f32 %v763, %v775
    %v784 = vmul.f32 %v764, %v775
    %v785 = vmul.f32 %v765, %v775
    %v786 = vmul.f32 %v766, %v775
    %v787 = vmul.f32 %v767, %v775
    %v788 = vmul.f32 %v768, %v775
    %v789 = vmul.f32 %v769, %v775
    %v790 = vmul.f32 %v770, %v775
    %v792 = vlaneseq
    %v793 = vshrl.u32 %v792, 7
    %v794 = vsub.s32 0, %v793
    %v795 = vrot.slane %v658, %v794
    %v797 = vadd.f32 %v777, %v795
    %v798 = vadd.f32 %v778, %v795
    %v799 = vadd.f32 %v779, %v795
    %v800 = vadd.f32 %v780, %v795
    %v801 = vadd.f32 %v781, %v795
    %v802 = vadd.f32 %v782, %v795
    %v803 = vadd.f32 %v783, %v795
    %v804 = vadd.f32 %v784, %v795
    %v805 = vadd.f32 %v785, %v795
    %v806 = vadd.f32 %v786, %v795
    %v807 = vadd.f32 %v787, %v795
    %v808 = vadd.f32 %v788, %v795
    %v809 = vadd.f32 %v789, %v795
    %v810 = vadd.f32 %v790, %v795
    %v811 = vmul.f32 %v797, 0.01
    %v812 = vmul.f32 %v798, 0.01
    %v813 = vmul.f32 %v799, 0.01
    %v814 = vmul.f32 %v800, 0.01
    %v815 = vmul.f32 %v801, 0.01
    %v816 = vmul.f32 %v802, 0.01
    %v817 = vmul.f32 %v803, 0.01
    %v818 = vmul.f32 %v804, 0.01
    %v819 = vmul.f32 %v805, 0.01
    %v820 = vmul.f32 %v806, 0.01
    %v821 = vmul.f32 %v807, 0.01
    %v822 = vmul.f32 %v808, 0.01
    %v823 = vmul.f32 %v809, 0.01
    %v824 = vmul.f32 %v810, 0.01
    %v825 = vmax.f32 %v797, %v811
    %v826 = vmax.f32 %v798, %v812
    %v827 = vmax.f32 %v799, %v813
    %v828 = vmax.f32 %v800, %v814
    %v829 = vmax.f32 %v801, %v815
    %v830 = vmax.f32 %v802, %v816
    %v831 = vmax.f32 %v803, %v817
    %v832 = vmax.f32 %v804, %v818
    %v833 = vmax.f32 %v805, %v819
    %v834 = vmax.f32 %v806, %v820
    %v835 = vmax.f32 %v807, %v821
    %v836 = vmax.f32 %v808, %v822
    %v837 = vmax.f32 %v809, %v823
    %v838 = vmax.f32 %v810, %v824
    %v839 = vld [vmem:[%s5] sm:$0xff]
    %v840 = vld [vmem:[%s5 + $0x8] sm:$0xff]
    %v841 = vld [vmem:[%s5 + $0x10] sm:$0xff]
    %v842 = vld [vmem:[%s5 + $0x18] sm:$0xff]
    %v843 = vld [vmem:[%s5 + $0x20] sm:$0xff]
    %v844 = vld [vmem:[%s5 + $0x28] sm:$0xff]
    %v845 = vld [vmem:[%s5 + $0x30] sm:$0xff]
    %v846 = vld [vmem:[%s5 + $0x38] sm:$0xff]
    %v847 = vld [vmem:[%s5 + $0x40] sm:$0xff]
    %v848 = vld [vmem:[%s5 + $0x48] sm:$0xff]
    %v849 = vld [vmem:[%s5 + $0x50] sm:$0xff]
    %v850 = vld [vmem:[%s5 + $0x58] sm:$0xff]
    %v851 = vld [vmem:[%s5 + $0x60] sm:$0xff]
    %v852 = vld [vmem:[%s5 + $0x68] sm:$0xff]
    %854 = vset.pattern.permute.xlu0 0
    %855 = vperm.xlu0 %854, %v839
    %v856 = vpop.permute.xlu0 %855
    %859 = vset.pattern.permute.xlu0 0
    %860 = vperm.xlu0 %859, %v840
    %v861 = vpop.permute.xlu0 %860
    %864 = vset.pattern.permute.xlu0 0
    %865 = vperm.xlu0 %864, %v841
    %v866 = vpop.permute.xlu0 %865
    %869 = vset.pattern.permute.xlu0 0
    %870 = vperm.xlu0 %869, %v842
    %v871 = vpop.permute.xlu0 %870
    %874 = vset.pattern.permute.xlu0 0
    %875 = vperm.xlu0 %874, %v843
    %v876 = vpop.permute.xlu0 %875
    %879 = vset.pattern.permute.xlu0 0
    %880 = vperm.xlu0 %879, %v844
    %v881 = vpop.permute.xlu0 %880
    %884 = vset.pattern.permute.xlu0 0
    %885 = vperm.xlu0 %884, %v845
    %v886 = vpop.permute.xlu0 %885
    %889 = vset.pattern.permute.xlu0 0
    %890 = vperm.xlu0 %889, %v846
    %v891 = vpop.permute.xlu0 %890
    %894 = vset.pattern.permute.xlu0 0
    %895 = vperm.xlu0 %894, %v847
    %v896 = vpop.permute.xlu0 %895
    %899 = vset.pattern.permute.xlu0 0
    %900 = vperm.xlu0 %899, %v848
    %v901 = vpop.permute.xlu0 %900
    %904 = vset.pattern.permute.xlu0 0
    %905 = vperm.xlu0 %904, %v849
    %v906 = vpop.permute.xlu0 %905
    %909 = vset.pattern.permute.xlu0 0
    %910 = vperm.xlu0 %909, %v850
    %v911 = vpop.permute.xlu0 %910
    %914 = vset.pattern.permute.xlu0 0
    %915 = vperm.xlu0 %914, %v851
    %v916 = vpop.permute.xlu0 %915
    %919 = vset.pattern.permute.xlu0 0
    %920 = vperm.xlu0 %919, %v852
    %v921 = vpop.permute.xlu0 %920
    %v923 = vmul.f32 %v825, %v856
    %v924 = vmul.f32 %v826, %v861
    %v925 = vmul.f32 %v827, %v866
    %v926 = vmul.f32 %v828, %v871
    %v927 = vmul.f32 %v829, %v876
    %v928 = vmul.f32 %v830, %v881
    %v929 = vmul.f32 %v831, %v886
    %v930 = vmul.f32 %v832, %v891
    %v931 = vmul.f32 %v833, %v896
    %v932 = vmul.f32 %v834, %v901
    %v933 = vmul.f32 %v835, %v906
    %v934 = vmul.f32 %v836, %v911
    %v935 = vmul.f32 %v837, %v916
    %v936 = vmul.f32 %v838, %v921
    %951 = vrot.lane.b32.xlu0 %v279, 96
    %v952 = vpop.permute.xlu0 %951
    %953 = vrot.lane.b32.xlu0 %v282, 96
    %v954 = vpop.permute.xlu0 %953
    %955 = vrot.lane.b32.xlu0 %v287, 96
    %v956 = vpop.permute.xlu0 %955
    %957 = vrot.lane.b32.xlu0 %v290, 96
    %v958 = vpop.permute.xlu0 %957
    %959 = vrot.lane.b32.xlu0 %v295, 96
    %v960 = vpop.permute.xlu0 %959
    %961 = vrot.lane.b32.xlu0 %v298, 96
    %v962 = vpop.permute.xlu0 %961
    %963 = vrot.lane.b32.xlu0 %v303, 96
    %v964 = vpop.permute.xlu0 %963
    %965 = vrot.lane.b32.xlu0 %v306, 96
    %v966 = vpop.permute.xlu0 %965
    %967 = vrot.lane.b32.xlu0 %v311, 96
    %v968 = vpop.permute.xlu0 %967
    %969 = vrot.lane.b32.xlu0 %v314, 96
    %v970 = vpop.permute.xlu0 %969
    %971 = vrot.lane.b32.xlu0 %v319, 96
    %v972 = vpop.permute.xlu0 %971
    %973 = vrot.lane.b32.xlu0 %v322, 96
    %v974 = vpop.permute.xlu0 %973
    %975 = vrot.lane.b32.xlu0 %v327, 96
    %v976 = vpop.permute.xlu0 %975
    %977 = vrot.lane.b32.xlu0 %v330, 96
    %v978 = vpop.permute.xlu0 %977
    %v993 = vadd.f32 %v923, %v952
    %v994 = vadd.f32 %v924, %v954
    %v995 = vadd.f32 %v925, %v956
    %v996 = vadd.f32 %v926, %v958
    %v997 = vadd.f32 %v927, %v960
    %v998 = vadd.f32 %v928, %v962
    %v999 = vadd.f32 %v929, %v964
    %v1000 = vadd.f32 %v930, %v966
    %v1001 = vadd.f32 %v931, %v968
    %v1002 = vadd.f32 %v932, %v970
    %v1003 = vadd.f32 %v933, %v972
    %v1004 = vadd.f32 %v934, %v974
    %v1005 = vadd.f32 %v935, %v976
    %v1006 = vadd.f32 %v936, %v978
    %v1007 = vmul.f32 %v993, 0.01
    %v1008 = vmul.f32 %v994, 0.01
    %v1009 = vmul.f32 %v995, 0.01
    %v1010 = vmul.f32 %v996, 0.01
    %v1011 = vmul.f32 %v997, 0.01
    %v1012 = vmul.f32 %v998, 0.01
    %v1013 = vmul.f32 %v999, 0.01
    %v1014 = vmul.f32 %v1000, 0.01
    %v1015 = vmul.f32 %v1001, 0.01
    %v1016 = vmul.f32 %v1002, 0.01
    %v1017 = vmul.f32 %v1003, 0.01
    %v1018 = vmul.f32 %v1004, 0.01
    %v1019 = vmul.f32 %v1005, 0.01
    %v1020 = vmul.f32 %v1006, 0.01
    %v1021 = vmax.f32 %v993, %v1007
    %v1022 = vmax.f32 %v994, %v1008
    %v1023 = vmax.f32 %v995, %v1009
    %v1024 = vmax.f32 %v996, %v1010
    %v1025 = vmax.f32 %v997, %v1011
    %v1026 = vmax.f32 %v998, %v1012
    %v1027 = vmax.f32 %v999, %v1013
    %v1028 = vmax.f32 %v1000, %v1014
    %v1029 = vmax.f32 %v1001, %v1015
    %v1030 = vmax.f32 %v1002, %v1016
    %v1031 = vmax.f32 %v1003, %v1017
    %v1032 = vmax.f32 %v1004, %v1018
    %v1033 = vmax.f32 %v1005, %v1019
    %v1034 = vmax.f32 %v1006, %v1020
    %v1035 = vpack.c.bf16 %v1022, %v1021
    %v1036 = vpack.c.bf16 %v1024, %v1023
    %v1037 = vpack.c.bf16 %v1026, %v1025
    %v1038 = vpack.c.bf16 %v1027, %v1027
    %v1039 = vpack.c.bf16 %v1029, %v1028
    %v1040 = vpack.c.bf16 %v1031, %v1030
    %v1041 = vpack.c.bf16 %v1033, %v1032
    %v1042 = vpack.c.bf16 %v1034, %v1034
    %v1043 = vld [vmem:[%s9] sm:$0xf]
    %v1044 = vld [vmem:[%s9 + $0x4] sm:$0xf]
    %vm1045 = vcmask 457728
    %v1047 = vsel %vm1045, %v1043, 0
    %vm1049 = vcmask 1043456
    %v1051 = vsel %vm1049, %v1038, 0
    %1053 = vmatprep.subr.bf16.mxu0 0
    %1054 = vmatpush1.bf16.msra.mxu0 %v1035
    %1055 = vmatprep.subr.bf16.mxu0 0
    %1056 = vmatpush1.bf16.msra.mxu0 %v1036
    %1057 = vmatprep.subr.bf16.mxu0 0
    %1058 = vmatpush1.bf16.msra.mxu0 %v1037
    %1059 = vmatprep.subr.bf16.mxu0 0
    %1060 = vmatpush1.bf16.msra.mxu0 %v1051
    %1061 = vmatprep.subr.bf16.mxu0 0
    %1062 = vmatpush1.bf16.msra.mxu0 0
    %1063 = vmatprep.subr.bf16.mxu0 0
    %1064 = vmatpush1.bf16.msra.mxu0 0
    %1065 = vmatprep.subr.bf16.mxu0 0
    %1066 = vmatpush1.bf16.msra.mxu0 0
    %1067 = vmatprep.subr.bf16.mxu0 0
    %1068 = vmatpush1.bf16.msra.mxu0 0
    %1069 = vmatprep.subr.bf16.mxu0 0
    %1070 = vmatpush1.bf16.msra.mxu0 0
    %1071 = vmatprep.subr.bf16.mxu0 0
    %1072 = vmatpush1.bf16.msra.mxu0 0
    %1073 = vmatprep.subr.bf16.mxu0 0
    %1074 = vmatpush1.bf16.msra.mxu0 0
    %1075 = vmatprep.subr.bf16.mxu0 0
    %1076 = vmatpush1.bf16.msra.mxu0 0
    %1077 = vmatprep.subr.bf16.mxu0 0
    %1078 = vmatpush1.bf16.msra.mxu0 0
    %1079 = vmatprep.subr.bf16.mxu0 0
    %1080 = vmatpush1.bf16.msra.mxu0 0
    %1081 = vmatprep.subr.bf16.mxu0 0
    %1082 = vmatpush1.bf16.msra.mxu0 0
    %1083 = vmatprep.subr.bf16.mxu0 0
    %1084 = vmatpush1.bf16.msra.mxu0 0
    %1085 = vmatprep.mubr.bf16.mxu0 0
    %1086 = vmatmul.mubr.bf16.gmra.mrb[0].mxu0 %v1047
    %v1087 = vpop.f32.mrb[0].mxu0
    %v1088 = vadd.f32 0.0, %v1087
    %v1089 = vpop.f32.mrb[0].mxu0
    %v1090 = vpop.f32.mrb[0].mxu0
    %v1091 = vpop.f32.mrb[0].mxu0
    %1092 = vdwg.mxu0
    %v1094 = vsel %vm1045, %v1044, 0
    %v1097 = vsel %vm1049, %v1042, 0
    %1099 = vmatprep.subr.bf16.mxu0 0
    %1100 = vmatpush1.bf16.msra.mxu0 %v1039
    %1101 = vmatprep.subr.bf16.mxu0 0
    %1102 = vmatpush1.bf16.msra.mxu0 %v1040
    %1103 = vmatprep.subr.bf16.mxu0 0
    %1104 = vmatpush1.bf16.msra.mxu0 %v1041
    %1105 = vmatprep.subr.bf16.mxu0 0
    %1106 = vmatpush1.bf16.msra.mxu0 %v1097
    %1107 = vmatprep.subr.bf16.mxu0 0
    %1108 = vmatpush1.bf16.msra.mxu0 0
    %1109 = vmatprep.subr.bf16.mxu0 0
    %1110 = vmatpush1.bf16.msra.mxu0 0
    %1111 = vmatprep.subr.bf16.mxu0 0
    %1112 = vmatpush1.bf16.msra.mxu0 0
    %1113 = vmatprep.subr.bf16.mxu0 0
    %1114 = vmatpush1.bf16.msra.mxu0 0
    %1115 = vmatprep.subr.bf16.mxu0 0
    %1116 = vmatpush1.bf16.msra.mxu0 0
    %1117 = vmatprep.subr.bf16.mxu0 0
    %1118 = vmatpush1.bf16.msra.mxu0 0
    %1119 = vmatprep.subr.bf16.mxu0 0
    %1120 = vmatpush1.bf16.msra.mxu0 0
    %1121 = vmatprep.subr.bf16.mxu0 0
    %1122 = vmatpush1.bf16.msra.mxu0 0
    %1123 = vmatprep.subr.bf16.mxu0 0
    %1124 = vmatpush1.bf16.msra.mxu0 0
    %1125 = vmatprep.subr.bf16.mxu0 0
    %1126 = vmatpush1.bf16.msra.mxu0 0
    %1127 = vmatprep.subr.bf16.mxu0 0
    %1128 = vmatpush1.bf16.msra.mxu0 0
    %1129 = vmatprep.subr.bf16.mxu0 0
    %1130 = vmatpush1.bf16.msra.mxu0 0
    %1131 = vmatprep.mubr.bf16.mxu0 0
    %1132 = vmatmul.mubr.bf16.gmra.mrb[0].mxu0 %v1094
    %v1133 = vpop.f32.mrb[0].mxu0
    %v1134 = vadd.f32 0.0, %v1133
    %v1135 = vpop.f32.mrb[0].mxu0
    %v1136 = vpop.f32.mrb[0].mxu0
    %v1137 = vpop.f32.mrb[0].mxu0
    %1138 = vdwg.mxu0
    %v1139 = vld [vmem:[%s3] sm:$0xf]
    %v1140 = vld [vmem:[%s3 + $0x4] sm:$0xf]
    %v1141 = vld [vmem:[%s49] sm:$0xf]
    %v1142 = vld [vmem:[%s51] sm:$0x1]
    %v1144 = vlaneseq
    %v1145 = vshrl.u32 %v1144, 7
    %v1146 = vsub.s32 0, %v1145
    %v1147 = vrot.slane %v1142, %v1146
    %v1151 = vunpack.c.l.b16 %v1139
    %v1152 = vunpack.c.l.b16 %v1140
    %v1153 = vpack.c.b16 %v1152, %v1151
    %vm1154 = vcmask 64512
    %v1156 = vsel %vm1154, %v1153, 0
    %v1159 = vsel %vm1049, %v1141, 0
    %1161 = vmatprep.subr.bf16.mxu0 0
    %1162 = vmatpush1.bf16.msra.mxu0 %v1159
    %1163 = vmatprep.subr.bf16.mxu0 0
    %1164 = vmatpush1.bf16.msra.mxu0 0
    %1165 = vmatprep.subr.bf16.mxu0 0
    %1166 = vmatpush1.bf16.msra.mxu0 0
    %1167 = vmatprep.subr.bf16.mxu0 0
    %1168 = vmatpush1.bf16.msra.mxu0 0
    %1169 = vmatprep.subr.bf16.mxu0 0
    %1170 = vmatpush1.bf16.msra.mxu0 0
    %1171 = vmatprep.subr.bf16.mxu0 0
    %1172 = vmatpush1.bf16.msra.mxu0 0
    %1173 = vmatprep.subr.bf16.mxu0 0
    %1174 = vmatpush1.bf16.msra.mxu0 0
    %1175 = vmatprep.subr.bf16.mxu0 0
    %1176 = vmatpush1.bf16.msra.mxu0 0
    %1177 = vmatprep.subr.bf16.mxu0 0
    %1178 = vmatpush1.bf16.msra.mxu0 0
    %1179 = vmatprep.subr.bf16.mxu0 0
    %1180 = vmatpush1.bf16.msra.mxu0 0
    %1181 = vmatprep.subr.bf16.mxu0 0
    %1182 = vmatpush1.bf16.msra.mxu0 0
    %1183 = vmatprep.subr.bf16.mxu0 0
    %1184 = vmatpush1.bf16.msra.mxu0 0
    %1185 = vmatprep.subr.bf16.mxu0 0
    %1186 = vmatpush1.bf16.msra.mxu0 0
    %1187 = vmatprep.subr.bf16.mxu0 0
    %1188 = vmatpush1.bf16.msra.mxu0 0
    %1189 = vmatprep.subr.bf16.mxu0 0
    %1190 = vmatpush1.bf16.msra.mxu0 0
    %1191 = vmatprep.subr.bf16.mxu0 0
    %1192 = vmatpush1.bf16.msra.mxu0 0
    %1193 = vmatprep.mubr.bf16.mxu0 0
    %1194 = vmatmul.mubr.bf16.gmra.mrb[0].mxu0 %v1156
    %v1195 = vpop.f32.mrb[0].mxu0
    %v1196 = vadd.f32 %v1147, %v1195
    %v1197 = vpop.f32.mrb[0].mxu0
    %v1198 = vpop.f32.mrb[0].mxu0
    %v1199 = vadd.f32 %v1147, %v1198
    %v1200 = vpop.f32.mrb[0].mxu0
    %1201 = vdwg.mxu0
    %v1202 = vld [vmem:[%s53] sm:$0x1]
    %v1203 = vld [vmem:[%s55] sm:$0x1]
    %v1204 = vsel %vm335, %v1196, 0.0
    %v1205 = vsel %vm335, %v1199, 0.0
    %v1206 = vadd.f32 %v1204, %v1205
    %v1207 = vrot.slane %v1206, 4
    %v1208 = vadd.f32 %v1206, %v1207
    %v1209 = vrot.slane %v1208, 2
    %v1210 = vadd.f32 %v1208, %v1209
    %v1211 = vrot.slane %v1210, 1
    %v1212 = vadd.f32 %v1210, %v1211
    %v1213 = vrcp.pop 16.0
    %v1214 = vmul.f32 %v1212, %v1213
    %v1215 = vsub.f32 %v1196, %v1214
    %v1216 = vsub.f32 %v1199, %v1214
    %v1217 = vmul.f32 %v1215, %v1215
    %v1218 = vmul.f32 %v1216, %v1216
    %v1219 = vsel %vm335, %v1217, 0.0
    %v1220 = vsel %vm335, %v1218, 0.0
    %v1221 = vadd.f32 %v1219, %v1220
    %v1222 = vrot.slane %v1221, 4
    %v1223 = vadd.f32 %v1221, %v1222
    %v1224 = vrot.slane %v1223, 2
    %v1225 = vadd.f32 %v1223, %v1224
    %v1226 = vrot.slane %v1225, 1
    %v1227 = vadd.f32 %v1225, %v1226
    %v1228 = vmul.f32 %v1227, %v1213
    %v1229 = vadd.f32 %v1228, 1e-05
    %v1230 = vrsqrt.pop %v1229
    %v1231 = vmul.f32 %v1215, %v1230
    %v1232 = vmul.f32 %v1216, %v1230
    %v1234 = vlaneseq
    %v1235 = vshrl.u32 %v1234, 7
    %v1236 = vsub.s32 0, %v1235
    %v1237 = vrot.slane %v1202, %v1236
    %v1239 = vmul.f32 %v1231, %v1237
    %v1240 = vmul.f32 %v1232, %v1237
    %v1242 = vlaneseq
    %v1243 = vshrl.u32 %v1242, 7
    %v1244 = vsub.s32 0, %v1243
    %v1245 = vrot.slane %v1203, %v1244
    %v1247 = vadd.f32 %v1239, %v1245
    %v1248 = vadd.f32 %v1240, %v1245
    %v1249 = vmul.f32 %v1247, 0.01
    %v1250 = vmul.f32 %v1248, 0.01
    %v1251 = vmax.f32 %v1247, %v1249
    %v1252 = vmax.f32 %v1248, %v1250
    %v1253 = vld [vmem:[%s57] sm:$0xf]
    %v1254 = vld [vmem:[%s57 + $0x4] sm:$0xf]
    %v1255 = vld [vmem:[%s57 + $0x8] sm:$0xf]
    %v1256 = vld [vmem:[%s57 + $0xc] sm:$0xf]
    %v1257 = vpack.c.bf16 %v1252, %v1251
    %v1258 = vld [vmem:[%s59] sm:$0x1]
    %v1260 = vlaneseq
    %v1261 = vshrl.u32 %v1260, 7
    %v1262 = vsub.s32 0, %v1261
    %v1263 = vrot.slane %v1258, %v1262
    %v1269 = vunpack.c.l.b16 %v1253
    %v1270 = vunpack.c.l.b16 %v1254
    %v1271 = vunpack.c.l.b16 %v1255
    %v1272 = vunpack.c.l.b16 %v1256
    %v1273 = vpack.c.b16 %v1270, %v1269
    %v1274 = vpack.c.b16 %v1272, %v1271
    %v1278 = vsel %vm335, %v1257, 0
    %1280 = vmatprep.subr.bf16.mxu0 0
    %1281 = vmatpush1.bf16.msra.mxu0 %v1273
    %1282 = vmatprep.subr.bf16.mxu0 0
    %1283 = vmatpush1.bf16.msra.mxu0 %v1274
    %1284 = vmatprep.subr.bf16.mxu0 0
    %1285 = vmatpush1.bf16.msra.mxu0 0
    %1286 = vmatprep.subr.bf16.mxu0 0
    %1287 = vmatpush1.bf16.msra.mxu0 0
    %1288 = vmatprep.subr.bf16.mxu0 0
    %1289 = vmatpush1.bf16.msra.mxu0 0
    %1290 = vmatprep.subr.bf16.mxu0 0
    %1291 = vmatpush1.bf16.msra.mxu0 0
    %1292 = vmatprep.subr.bf16.mxu0 0
    %1293 = vmatpush1.bf16.msra.mxu0 0
    %1294 = vmatprep.subr.bf16.mxu0 0
    %1295 = vmatpush1.bf16.msra.mxu0 0
    %1296 = vmatprep.subr.bf16.mxu0 0
    %1297 = vmatpush1.bf16.msra.mxu0 0
    %1298 = vmatprep.subr.bf16.mxu0 0
    %1299 = vmatpush1.bf16.msra.mxu0 0
    %1300 = vmatprep.subr.bf16.mxu0 0
    %1301 = vmatpush1.bf16.msra.mxu0 0
    %1302 = vmatprep.subr.bf16.mxu0 0
    %1303 = vmatpush1.bf16.msra.mxu0 0
    %1304 = vmatprep.subr.bf16.mxu0 0
    %1305 = vmatpush1.bf16.msra.mxu0 0
    %1306 = vmatprep.subr.bf16.mxu0 0
    %1307 = vmatpush1.bf16.msra.mxu0 0
    %1308 = vmatprep.subr.bf16.mxu0 0
    %1309 = vmatpush1.bf16.msra.mxu0 0
    %1310 = vmatprep.subr.bf16.mxu0 0
    %1311 = vmatpush1.bf16.msra.mxu0 0
    %1312 = vmatprep.mubr.bf16.mxu0 0
    %1313 = vmatmul.mubr.bf16.gmra.mrb[0].mxu0 %v1278
    %v1314 = vpop.f32.mrb[0].mxu0
    %v1315 = vadd.f32 %v1263, %v1314
    %v1316 = vpop.f32.mrb[0].mxu0
    %v1317 = vpop.f32.mrb[0].mxu0
    %v1318 = vadd.f32 %v1263, %v1317
    %v1319 = vpop.f32.mrb[0].mxu0
    %1320 = vdwg.mxu0
    %v1321 = vld [vmem:[%s61] sm:$0x1]
    %v1322 = vld [vmem:[%s63] sm:$0x1]
    %v1323 = vsel %vm335, %v1315, 0.0
    %v1324 = vsel %vm335, %v1318, 0.0
    %v1325 = vadd.f32 %v1323, %v1324
    %v1326 = vrot.slane %v1325, 4
    %v1327 = vadd.f32 %v1325, %v1326
    %v1328 = vrot.slane %v1327, 2
    %v1329 = vadd.f32 %v1327, %v1328
    %v1330 = vrot.slane %v1329, 1
    %v1331 = vadd.f32 %v1329, %v1330
    %v1332 = vmul.f32 %v1331, %v1213
    %v1333 = vsub.f32 %v1315, %v1332
    %v1334 = vsub.f32 %v1318, %v1332
    %v1335 = vmul.f32 %v1333, %v1333
    %v1336 = vmul.f32 %v1334, %v1334
    %v1337 = vsel %vm335, %v1335, 0.0
    %v1338 = vsel %vm335, %v1336, 0.0
    %v1339 = vadd.f32 %v1337, %v1338
    %v1340 = vrot.slane %v1339, 4
    %v1341 = vadd.f32 %v1339, %v1340
    %v1342 = vrot.slane %v1341, 2
    %v1343 = vadd.f32 %v1341, %v1342
    %v1344 = vrot.slane %v1343, 1
    %v1345 = vadd.f32 %v1343, %v1344
    %v1346 = vmul.f32 %v1345, %v1213
    %v1347 = vadd.f32 %v1346, 1e-05
    %v1348 = vrsqrt.pop %v1347
    %v1349 = vmul.f32 %v1333, %v1348
    %v1350 = vmul.f32 %v1334, %v1348
    %v1352 = vlaneseq
    %v1353 = vshrl.u32 %v1352, 7
    %v1354 = vsub.s32 0, %v1353
    %v1355 = vrot.slane %v1321, %v1354
    %v1357 = vmul.f32 %v1349, %v1355
    %v1358 = vmul.f32 %v1350, %v1355
    %v1360 = vlaneseq
    %v1361 = vshrl.u32 %v1360, 7
    %v1362 = vsub.s32 0, %v1361
    %v1363 = vrot.slane %v1322, %v1362
    %v1365 = vadd.f32 %v1357, %v1363
    %v1366 = vadd.f32 %v1358, %v1363
    %v1367 = vmul.f32 %v1365, 0.01
    %v1368 = vmul.f32 %v1366, 0.01
    %v1369 = vmax.f32 %v1365, %v1367
    %v1370 = vmax.f32 %v1366, %v1368
    %v1371 = vld [vmem:[%s7] sm:$0xff]
    %v1372 = vld [vmem:[%s7 + $0x8] sm:$0xff]
    %1374 = vset.pattern.permute.xlu0 0
    %1375 = vperm.xlu0 %1374, %v1371
    %v1376 = vpop.permute.xlu0 %1375
    %1379 = vset.pattern.permute.xlu0 0
    %1380 = vperm.xlu0 %1379, %v1372
    %v1381 = vpop.permute.xlu0 %1380
    %v1383 = vmul.f32 %v1369, %v1376
    %v1384 = vmul.f32 %v1370, %v1381
    %v1385 = vpack.c.bf16 %v1383, %v1383
    %v1386 = vpack.c.bf16 %v1384, %v1384
    %v1387 = vld [vmem:[%s11] sm:$0xf]
    %v1388 = vld [vmem:[%s11 + $0x4] sm:$0xf]
    %v1390 = vsel %vm1154, %v1387, 0
    %v1393 = vsel %vm1049, %v1385, 0
    %1395 = vmatprep.subr.bf16.mxu0 0
    %1396 = vmatpush1.bf16.msra.mxu0 %v1393
    %1397 = vmatprep.subr.bf16.mxu0 0
    %1398 = vmatpush1.bf16.msra.mxu0 0
    %1399 = vmatprep.subr.bf16.mxu0 0
    %1400 = vmatpush1.bf16.msra.mxu0 0
    %1401 = vmatprep.subr.bf16.mxu0 0
    %1402 = vmatpush1.bf16.msra.mxu0 0
    %1403 = vmatprep.subr.bf16.mxu0 0
    %1404 = vmatpush1.bf16.msra.mxu0 0
    %1405 = vmatprep.subr.bf16.mxu0 0
    %1406 = vmatpush1.bf16.msra.mxu0 0
    %1407 = vmatprep.subr.bf16.mxu0 0
    %1408 = vmatpush1.bf16.msra.mxu0 0
    %1409 = vmatprep.subr.bf16.mxu0 0
    %1410 = vmatpush1.bf16.msra.mxu0 0
    %1411 = vmatprep.subr.bf16.mxu0 0
    %1412 = vmatpush1.bf16.msra.mxu0 0
    %1413 = vmatprep.subr.bf16.mxu0 0
    %1414 = vmatpush1.bf16.msra.mxu0 0
    %1415 = vmatprep.subr.bf16.mxu0 0
    %1416 = vmatpush1.bf16.msra.mxu0 0
    %1417 = vmatprep.subr.bf16.mxu0 0
    %1418 = vmatpush1.bf16.msra.mxu0 0
    %1419 = vmatprep.subr.bf16.mxu0 0
    %1420 = vmatpush1.bf16.msra.mxu0 0
    %1421 = vmatprep.subr.bf16.mxu0 0
    %1422 = vmatpush1.bf16.msra.mxu0 0
    %1423 = vmatprep.subr.bf16.mxu0 0
    %1424 = vmatpush1.bf16.msra.mxu0 0
    %1425 = vmatprep.subr.bf16.mxu0 0
    %1426 = vmatpush1.bf16.msra.mxu0 0
    %1427 = vmatprep.mubr.bf16.mxu0 0
    %1428 = vmatmul.mubr.bf16.gmra.mrb[0].mxu0 %v1390
    %v1429 = vpop.f32.mrb[0].mxu0
    %v1430 = vadd.f32 0.0, %v1429
    %v1431 = vpop.f32.mrb[0].mxu0
    %v1432 = vpop.f32.mrb[0].mxu0
    %v1433 = vpop.f32.mrb[0].mxu0
    %1434 = vdwg.mxu0
    %v1436 = vsel %vm1154, %v1388, 0
    %v1439 = vsel %vm1049, %v1386, 0
    %1441 = vmatprep.subr.bf16.mxu0 0
    %1442 = vmatpush1.bf16.msra.mxu0 %v1439
    %1443 = vmatprep.subr.bf16.mxu0 0
    %1444 = vmatpush1.bf16.msra.mxu0 0
    %1445 = vmatprep.subr.bf16.mxu0 0
    %1446 = vmatpush1.bf16.msra.mxu0 0
    %1447 = vmatprep.subr.bf16.mxu0 0
    %1448 = vmatpush1.bf16.msra.mxu0 0
    %1449 = vmatprep.subr.bf16.mxu0 0
    %1450 = vmatpush1.bf16.msra.mxu0 0
    %1451 = vmatprep.subr.bf16.mxu0 0
    %1452 = vmatpush1.bf16.msra.mxu0 0
    %1453 = vmatprep.subr.bf16.mxu0 0
    %1454 = vmatpush1.bf16.msra.mxu0 0
    %1455 = vmatprep.subr.bf16.mxu0 0
    %1456 = vmatpush1.bf16.msra.mxu0 0
    %1457 = vmatprep.subr.bf16.mxu0 0
    %1458 = vmatpush1.bf16.msra.mxu0 0
    %1459 = vmatprep.subr.bf16.mxu0 0
    %1460 = vmatpush1.bf16.msra.mxu0 0
    %1461 = vmatprep.subr.bf16.mxu0 0
    %1462 = vmatpush1.bf16.msra.mxu0 0
    %1463 = vmatprep.subr.bf16.mxu0 0
    %1464 = vmatpush1.bf16.msra.mxu0 0
    %1465 = vmatprep.subr.bf16.mxu0 0
    %1466 = vmatpush1.bf16.msra.mxu0 0
    %1467 = vmatprep.subr.bf16.mxu0 0
    %1468 = vmatpush1.bf16.msra.mxu0 0
    %1469 = vmatprep.subr.bf16.mxu0 0
    %1470 = vmatpush1.bf16.msra.mxu0 0
    %1471 = vmatprep.subr.bf16.mxu0 0
    %1472 = vmatpush1.bf16.msra.mxu0 0
    %1473 = vmatprep.mubr.bf16.mxu0 0
    %1474 = vmatmul.mubr.bf16.gmra.mrb[0].mxu0 %v1436
    %v1475 = vpop.f32.mrb[0].mxu0
    %v1476 = vadd.f32 0.0, %v1475
    %v1477 = vpop.f32.mrb[0].mxu0
    %v1478 = vpop.f32.mrb[0].mxu0
    %v1479 = vpop.f32.mrb[0].mxu0
    %1480 = vdwg.mxu0
    %1483 = vrot.lane.b32.xlu0 %v1430, 32
    %v1484 = vpop.permute.xlu0 %1483
    %1485 = vrot.lane.b32.xlu0 %v1476, 32
    %v1486 = vpop.permute.xlu0 %1485
    %v1489 = vsel %vm335, %v1088, %v1484
    %v1490 = vsel %vm335, %v1134, %v1486
    %v1491 = vld [vmem:[%s65] sm:$0xf]
    %v1492 = vld [vmem:[%s65 + $0x4] sm:$0xf]
    %v1493 = vld [vmem:[%s65 + $0x8] sm:$0xf]
    %v1494 = vld [vmem:[%s65 + $0xc] sm:$0xf]
    %v1495 = vld [vmem:[%s65 + $0x10] sm:$0xf]
    %v1496 = vld [vmem:[%s65 + $0x14] sm:$0xf]
    %v1497 = vld [vmem:[%s65 + $0x18] sm:$0xf]
    %v1498 = vld [vmem:[%s65 + $0x1c] sm:$0xf]
    %v1499 = vpack.c.bf16 %v1490, %v1489
    %v1500 = vld [vmem:[%s67] sm:$0x1]
    %v1502 = vlaneseq
    %v1503 = vshrl.u32 %v1502, 7
    %v1504 = vsub.s32 0, %v1503
    %v1505 = vrot.slane %v1500, %v1504
    %v1515 = vunpack.c.l.b16 %v1491
    %v1516 = vunpack.c.l.b16 %v1492
    %v1517 = vunpack.c.l.b16 %v1493
    %v1518 = vunpack.c.l.b16 %v1494
    %v1519 = vunpack.c.l.b16 %v1495
    %v1520 = vunpack.c.l.b16 %v1496
    %v1521 = vunpack.c.l.b16 %v1497
    %v1522 = vunpack.c.l.b16 %v1498
    %v1523 = vpack.c.b16 %v1516, %v1515
    %v1524 = vpack.c.b16 %v1518, %v1517
    %v1525 = vpack.c.b16 %v1520, %v1519
    %v1526 = vpack.c.b16 %v1522, %v1521
    %vm1531 = vcmask 523264
    %v1533 = vsel %vm1531, %v1499, 0
    %1535 = vmatprep.subr.bf16.mxu0 0
    %1536 = vmatpush1.bf16.msra.mxu0 %v1523
    %1537 = vmatprep.subr.bf16.mxu0 0
    %1538 = vmatpush1.bf16.msra.mxu0 %v1524
    %1539 = vmatprep.subr.bf16.mxu0 0
    %1540 = vmatpush1.bf16.msra.mxu0 %v1525
    %1541 = vmatprep.subr.bf16.mxu0 0
    %1542 = vmatpush1.bf16.msra.mxu0 %v1526
    %1543 = vmatprep.subr.bf16.mxu0 0
    %1544 = vmatpush1.bf16.msra.mxu0 0
    %1545 = vmatprep.subr.bf16.mxu0 0
    %1546 = vmatpush1.bf16.msra.mxu0 0
    %1547 = vmatprep.subr.bf16.mxu0 0
    %1548 = vmatpush1.bf16.msra.mxu0 0
    %1549 = vmatprep.subr.bf16.mxu0 0
    %1550 = vmatpush1.bf16.msra.mxu0 0
    %1551 = vmatprep.subr.bf16.mxu0 0
    %1552 = vmatpush1.bf16.msra.mxu0 0
    %1553 = vmatprep.subr.bf16.mxu0 0
    %1554 = vmatpush1.bf16.msra.mxu0 0
    %1555 = vmatprep.subr.bf16.mxu0 0
    %1556 = vmatpush1.bf16.msra.mxu0 0
    %1557 = vmatprep.subr.bf16.mxu0 0
    %1558 = vmatpush1.bf16.msra.mxu0 0
    %1559 = vmatprep.subr.bf16.mxu0 0
    %1560 = vmatpush1.bf16.msra.mxu0 0
    %1561 = vmatprep.subr.bf16.mxu0 0
    %1562 = vmatpush1.bf16.msra.mxu0 0
    %1563 = vmatprep.subr.bf16.mxu0 0
    %1564 = vmatpush1.bf16.msra.mxu0 0
    %1565 = vmatprep.subr.bf16.mxu0 0
    %1566 = vmatpush1.bf16.msra.mxu0 0
    %1567 = vmatprep.mubr.bf16.mxu0 0
    %1568 = vmatmul.mubr.bf16.gmra.mrb[0].mxu0 %v1533
    %v1569 = vpop.f32.mrb[0].mxu0
    %v1570 = vadd.f32 %v1505, %v1569
    %v1571 = vpop.f32.mrb[0].mxu0
    %v1572 = vpop.f32.mrb[0].mxu0
    %v1573 = vadd.f32 %v1505, %v1572
    %v1574 = vpop.f32.mrb[0].mxu0
    %1575 = vdwg.mxu0
    %v1576 = vmul.f32 %v1570, 0.01
    %v1577 = vmul.f32 %v1573, 0.01
    %v1578 = vmax.f32 %v1570, %v1576
    %v1579 = vmax.f32 %v1573, %v1577
    %v1580 = vld [vmem:[%s69] sm:$0xf]
    %v1581 = vld [vmem:[%s69 + $0x4] sm:$0xf]
    %v1582 = vld [vmem:[%s69 + $0x8] sm:$0xf]
    %v1583 = vld [vmem:[%s69 + $0xc] sm:$0xf]
    %v1584 = vpack.c.bf16 %v1579, %v1578
    %v1585 = vld [vmem:[%s71] sm:$0x1]
    %v1587 = vlaneseq
    %v1588 = vshrl.u32 %v1587, 7
    %v1589 = vsub.s32 0, %v1588
    %v1590 = vrot.slane %v1585, %v1589
    %v1596 = vunpack.c.l.b16 %v1580
    %v1597 = vunpack.c.l.b16 %v1581
    %v1598 = vunpack.c.l.b16 %v1582
    %v1599 = vunpack.c.l.b16 %v1583
    %v1600 = vpack.c.b16 %v1597, %v1596
    %v1601 = vpack.c.b16 %v1599, %v1598
    %v1605 = vsel %vm335, %v1584, 0
    %1607 = vmatprep.subr.bf16.mxu0 0
    %1608 = vmatpush1.bf16.msra.mxu0 %v1600
    %1609 = vmatprep.subr.bf16.mxu0 0
    %1610 = vmatpush1.bf16.msra.mxu0 %v1601
    %1611 = vmatprep.subr.bf16.mxu0 0
    %1612 = vmatpush1.bf16.msra.mxu0 0
    %1613 = vmatprep.subr.bf16.mxu0 0
    %1614 = vmatpush1.bf16.msra.mxu0 0
    %1615 = vmatprep.subr.bf16.mxu0 0
    %1616 = vmatpush1.bf16.msra.mxu0 0
    %1617 = vmatprep.subr.bf16.mxu0 0
    %1618 = vmatpush1.bf16.msra.mxu0 0
    %1619 = vmatprep.subr.bf16.mxu0 0
    %1620 = vmatpush1.bf16.msra.mxu0 0
    %1621 = vmatprep.subr.bf16.mxu0 0
    %1622 = vmatpush1.bf16.msra.mxu0 0
    %1623 = vmatprep.subr.bf16.mxu0 0
    %1624 = vmatpush1.bf16.msra.mxu0 0
    %1625 = vmatprep.subr.bf16.mxu0 0
    %1626 = vmatpush1.bf16.msra.mxu0 0
    %1627 = vmatprep.subr.bf16.mxu0 0
    %1628 = vmatpush1.bf16.msra.mxu0 0
    %1629 = vmatprep.subr.bf16.mxu0 0
    %1630 = vmatpush1.bf16.msra.mxu0 0
    %1631 = vmatprep.subr.bf16.mxu0 0
    %1632 = vmatpush1.bf16.msra.mxu0 0
    %1633 = vmatprep.subr.bf16.mxu0 0
    %1634 = vmatpush1.bf16.msra.mxu0 0
    %1635 = vmatprep.subr.bf16.mxu0 0
    %1636 = vmatpush1.bf16.msra.mxu0 0
    %1637 = vmatprep.subr.bf16.mxu0 0
    %1638 = vmatpush1.bf16.msra.mxu0 0
    %1639 = vmatprep.mubr.bf16.mxu0 0
    %1640 = vmatmul.mubr.bf16.gmra.mrb[0].mxu0 %v1605
    %v1641 = vpop.f32.mrb[0].mxu0
    %v1642 = vadd.f32 %v1590, %v1641
    %v1643 = vpop.f32.mrb[0].mxu0
    %v1644 = vpop.f32.mrb[0].mxu0
    %v1645 = vadd.f32 %v1590, %v1644
    %v1646 = vpop.f32.mrb[0].mxu0
    %1647 = vdwg.mxu0
    %v1648 = vsub.f32 %v1642, %v1642
    %v1649 = vsub.f32 %v1645, %v1645
    %v1650 = vmul.f32 %v1648, 1.442695
    %v1651 = vpow.pop %v1650
    %v1652 = vmul.f32 %v1649, 1.442695
    %v1653 = vpow.pop %v1652
    %v1654 = vadd.f32 %v1651, 0.0
    %v1655 = vadd.f32 %v1653, 0.0
    %v1656 = vrcp.pop %v1654
    %v1657 = vmul.f32 %v1651, %v1656
    %v1658 = vrcp.pop %v1655
    %v1659 = vmul.f32 %v1653, %v1658
    %vm1660 = vcmask 7168
    %1661 = vst.msk [vmem:[%s75] sm:$0xff] %vm1660, %v1657
    %1662 = vst.msk [vmem:[%s75 + $0x8] sm:$0xff] %vm1660, %v1659
    %v1663 = vld [vmem:[%s29] sm:$0x1]
    %v1665 = vsel %vm1660, %v1657, 0
    %v1668 = vsel %vm1660, %v1659, 0
    %vm1670 = vcmask 1040384
    %v1672 = vsel %vm1670, %v1663, 0
    %1674 = vmatprep.subr.mxu0 0.0
    %1675 = vmatpush1.msra.mxu0 %v1672
    %1676 = vmatprep.subr.mxu0 0.0
    %1677 = vmatpush1.msra.mxu0 0.0
    %1678 = vmatprep.subr.mxu0 0.0
    %1679 = vmatpush1.msra.mxu0 0.0
    %1680 = vmatprep.subr.mxu0 0.0
    %1681 = vmatpush1.msra.mxu0 0.0
    %1682 = vmatprep.subr.mxu0 0.0
    %1683 = vmatpush1.msra.mxu0 0.0
    %1684 = vmatprep.subr.mxu0 0.0
    %1685 = vmatpush1.msra.mxu0 0.0
    %1686 = vmatprep.subr.mxu0 0.0
    %1687 = vmatpush1.msra.mxu0 0.0
    %1688 = vmatprep.subr.mxu0 0.0
    %1689 = vmatpush1.msra.mxu0 0.0
    %1690 = vmatprep.subr.mxu0 0.0
    %1691 = vmatpush1.msra.mxu0 0.0
    %1692 = vmatprep.subr.mxu0 0.0
    %1693 = vmatpush1.msra.mxu0 0.0
    %1694 = vmatprep.subr.mxu0 0.0
    %1695 = vmatpush1.msra.mxu0 0.0
    %1696 = vmatprep.subr.mxu0 0.0
    %1697 = vmatpush1.msra.mxu0 0.0
    %1698 = vmatprep.subr.mxu0 0.0
    %1699 = vmatpush1.msra.mxu0 0.0
    %1700 = vmatprep.subr.mxu0 0.0
    %1701 = vmatpush1.msra.mxu0 0.0
    %1702 = vmatprep.subr.mxu0 0.0
    %1703 = vmatpush1.msra.mxu0 0.0
    %1704 = vmatprep.subr.mxu0 0.0
    %1705 = vmatpush1.msra.mxu0 0.0
    %1706 = vmatprep.subr.mxu0 0.0
    %1707 = vmatpush1.msra.mxu0 0.0
    %1708 = vmatprep.subr.mxu0 0.0
    %1709 = vmatpush1.msra.mxu0 0.0
    %1710 = vmatprep.subr.mxu0 0.0
    %1711 = vmatpush1.msra.mxu0 0.0
    %1712 = vmatprep.subr.mxu0 0.0
    %1713 = vmatpush1.msra.mxu0 0.0
    %1714 = vmatprep.subr.mxu0 0.0
    %1715 = vmatpush1.msra.mxu0 0.0
    %1716 = vmatprep.subr.mxu0 0.0
    %1717 = vmatpush1.msra.mxu0 0.0
    %1718 = vmatprep.subr.mxu0 0.0
    %1719 = vmatpush1.msra.mxu0 0.0
    %1720 = vmatprep.subr.mxu0 0.0
    %1721 = vmatpush1.msra.mxu0 0.0
    %1722 = vmatprep.subr.mxu0 0.0
    %1723 = vmatpush1.msra.mxu0 0.0
    %1724 = vmatprep.subr.mxu0 0.0
    %1725 = vmatpush1.msra.mxu0 0.0
    %1726 = vmatprep.subr.mxu0 0.0
    %1727 = vmatpush1.msra.mxu0 0.0
    %1728 = vmatprep.subr.mxu0 0.0
    %1729 = vmatpush1.msra.mxu0 0.0
    %1730 = vmatprep.subr.mxu0 0.0
    %1731 = vmatpush1.msra.mxu0 0.0
    %1732 = vmatprep.subr.mxu0 0.0
    %1733 = vmatpush1.msra.mxu0 0.0
    %1734 = vmatprep.subr.mxu0 0.0
    %1735 = vmatpush1.msra.mxu0 0.0
    %1736 = vmatprep.subr.mxu0 0.0
    %1737 = vmatpush1.msra.mxu0 0.0
    %1738 = vmatprep.mubr.f32.mxu0 0.0
    %1739 = vmatmul.mubr.f32.gmra.mrb[0].mxu0 %v1665
    %v1740 = vpop.f32.mrb[0].mxu0
    %v1741 = vadd.f32 0.0, %v1740
    %v1742 = vpop.f32.mrb[0].mxu0
    %1743 = vmatprep.mubr.f32.mxu0 0.0
    %1744 = vmatmul.mubr.f32.gmra.mrb[0].mxu0 %v1668
    %v1745 = vpop.f32.mrb[0].mxu0
    %v1746 = vadd.f32 0.0, %v1745
    %v1747 = vpop.f32.mrb[0].mxu0
    %1748 = vdwg.mxu0
    %1751 = vrot.lane.b32.xlu0 %v1741, 1
    %v1752 = vpop.permute.xlu0 %1751
    %1753 = vrot.lane.b32.xlu0 %v1746, 1
    %v1754 = vpop.permute.xlu0 %1753
    %v1757 = vmul.f32 %v1642, %v1752
    %v1758 = vmul.f32 %v1645, %v1754
    %v1759 = vld [vmem:[%s31] sm:$0xf]
    %1762 = vrot.lane.b32.xlu0 %v1757, 127
    %v1763 = vpop.permute.xlu0 %1762
    %1764 = vrot.lane.b32.xlu0 %v1758, 127
    %v1765 = vpop.permute.xlu0 %1764
    %vm1766 = vcmask 31744
    %v1767 = vsel %vm1766, %v1763, 0
    %v1769 = vsel %vm1766, %v1765, 0
    %v1772 = vsel %vm1049, %v1759, 0
    %1774 = vmatprep.subr.mxu0 0.0
    %1775 = vmatpush1.msra.mxu0 %v1772
    %1776 = vmatprep.subr.mxu0 0.0
    %1777 = vmatpush1.msra.mxu0 0.0
    %1778 = vmatprep.subr.mxu0 0.0
    %1779 = vmatpush1.msra.mxu0 0.0
    %1780 = vmatprep.subr.mxu0 0.0
    %1781 = vmatpush1.msra.mxu0 0.0
    %1782 = vmatprep.subr.mxu0 0.0
    %1783 = vmatpush1.msra.mxu0 0.0
    %1784 = vmatprep.subr.mxu0 0.0
    %1785 = vmatpush1.msra.mxu0 0.0
    %1786 = vmatprep.subr.mxu0 0.0
    %1787 = vmatpush1.msra.mxu0 0.0
    %1788 = vmatprep.subr.mxu0 0.0
    %1789 = vmatpush1.msra.mxu0 0.0
    %1790 = vmatprep.subr.mxu0 0.0
    %1791 = vmatpush1.msra.mxu0 0.0
    %1792 = vmatprep.subr.mxu0 0.0
    %1793 = vmatpush1.msra.mxu0 0.0
    %1794 = vmatprep.subr.mxu0 0.0
    %1795 = vmatpush1.msra.mxu0 0.0
    %1796 = vmatprep.subr.mxu0 0.0
    %1797 = vmatpush1.msra.mxu0 0.0
    %1798 = vmatprep.subr.mxu0 0.0
    %1799 = vmatpush1.msra.mxu0 0.0
    %1800 = vmatprep.subr.mxu0 0.0
    %1801 = vmatpush1.msra.mxu0 0.0
    %1802 = vmatprep.subr.mxu0 0.0
    %1803 = vmatpush1.msra.mxu0 0.0
    %1804 = vmatprep.subr.mxu0 0.0
    %1805 = vmatpush1.msra.mxu0 0.0
    %1806 = vmatprep.subr.mxu0 0.0
    %1807 = vmatpush1.msra.mxu0 0.0
    %1808 = vmatprep.subr.mxu0 0.0
    %1809 = vmatpush1.msra.mxu0 0.0
    %1810 = vmatprep.subr.mxu0 0.0
    %1811 = vmatpush1.msra.mxu0 0.0
    %1812 = vmatprep.subr.mxu0 0.0
    %1813 = vmatpush1.msra.mxu0 0.0
    %1814 = vmatprep.subr.mxu0 0.0
    %1815 = vmatpush1.msra.mxu0 0.0
    %1816 = vmatprep.subr.mxu0 0.0
    %1817 = vmatpush1.msra.mxu0 0.0
    %1818 = vmatprep.subr.mxu0 0.0
    %1819 = vmatpush1.msra.mxu0 0.0
    %1820 = vmatprep.subr.mxu0 0.0
    %1821 = vmatpush1.msra.mxu0 0.0
    %1822 = vmatprep.subr.mxu0 0.0
    %1823 = vmatpush1.msra.mxu0 0.0
    %1824 = vmatprep.subr.mxu0 0.0
    %1825 = vmatpush1.msra.mxu0 0.0
    %1826 = vmatprep.subr.mxu0 0.0
    %1827 = vmatpush1.msra.mxu0 0.0
    %1828 = vmatprep.subr.mxu0 0.0
    %1829 = vmatpush1.msra.mxu0 0.0
    %1830 = vmatprep.subr.mxu0 0.0
    %1831 = vmatpush1.msra.mxu0 0.0
    %1832 = vmatprep.subr.mxu0 0.0
    %1833 = vmatpush1.msra.mxu0 0.0
    %1834 = vmatprep.subr.mxu0 0.0
    %1835 = vmatpush1.msra.mxu0 0.0
    %1836 = vmatprep.subr.mxu0 0.0
    %1837 = vmatpush1.msra.mxu0 0.0
    %1838 = vmatprep.mubr.f32.mxu0 0.0
    %1839 = vmatmul.mubr.f32.gmra.mrb[0].mxu0 %v1767
    %v1840 = vpop.f32.mrb[0].mxu0
    %v1841 = vadd.f32 0.0, %v1840
    %v1842 = vpop.f32.mrb[0].mxu0
    %1843 = vmatprep.mubr.f32.mxu0 0.0
    %1844 = vmatmul.mubr.f32.gmra.mrb[0].mxu0 %v1769
    %v1845 = vpop.f32.mrb[0].mxu0
    %v1846 = vadd.f32 0.0, %v1845
    %v1847 = vpop.f32.mrb[0].mxu0
    %1848 = vdwg.mxu0
    %v1849 = vld [vmem:[%s13] sm:$0xff]
    %v1850 = vld [vmem:[%s13 + $0x8] sm:$0xff]
    %v1851 = vld [vmem:[%s21] sm:$0xf]
    %v1853 = vsel %vm1766, %v1841, 0
    %v1856 = vsel %vm1766, %v1846, 0
    %v1859 = vsel %vm1049, %v1851, 0
    %1861 = vmatprep.subr.mxu0 0.0
    %1862 = vmatpush1.msra.mxu0 %v1859
    %1863 = vmatprep.subr.mxu0 0.0
    %1864 = vmatpush1.msra.mxu0 0.0
    %1865 = vmatprep.subr.mxu0 0.0
    %1866 = vmatpush1.msra.mxu0 0.0
    %1867 = vmatprep.subr.mxu0 0.0
    %1868 = vmatpush1.msra.mxu0 0.0
    %1869 = vmatprep.subr.mxu0 0.0
    %1870 = vmatpush1.msra.mxu0 0.0
    %1871 = vmatprep.subr.mxu0 0.0
    %1872 = vmatpush1.msra.mxu0 0.0
    %1873 = vmatprep.subr.mxu0 0.0
    %1874 = vmatpush1.msra.mxu0 0.0
    %1875 = vmatprep.subr.mxu0 0.0
    %1876 = vmatpush1.msra.mxu0 0.0
    %1877 = vmatprep.subr.mxu0 0.0
    %1878 = vmatpush1.msra.mxu0 0.0
    %1879 = vmatprep.subr.mxu0 0.0
    %1880 = vmatpush1.msra.mxu0 0.0
    %1881 = vmatprep.subr.mxu0 0.0
    %1882 = vmatpush1.msra.mxu0 0.0
    %1883 = vmatprep.subr.mxu0 0.0
    %1884 = vmatpush1.msra.mxu0 0.0
    %1885 = vmatprep.subr.mxu0 0.0
    %1886 = vmatpush1.msra.mxu0 0.0
    %1887 = vmatprep.subr.mxu0 0.0
    %1888 = vmatpush1.msra.mxu0 0.0
    %1889 = vmatprep.subr.mxu0 0.0
    %1890 = vmatpush1.msra.mxu0 0.0
    %1891 = vmatprep.subr.mxu0 0.0
    %1892 = vmatpush1.msra.mxu0 0.0
    %1893 = vmatprep.subr.mxu0 0.0
    %1894 = vmatpush1.msra.mxu0 0.0
    %1895 = vmatprep.subr.mxu0 0.0
    %1896 = vmatpush1.msra.mxu0 0.0
    %1897 = vmatprep.subr.mxu0 0.0
    %1898 = vmatpush1.msra.mxu0 0.0
    %1899 = vmatprep.subr.mxu0 0.0
    %1900 = vmatpush1.msra.mxu0 0.0
    %1901 = vmatprep.subr.mxu0 0.0
    %1902 = vmatpush1.msra.mxu0 0.0
    %1903 = vmatprep.subr.mxu0 0.0
    %1904 = vmatpush1.msra.mxu0 0.0
    %1905 = vmatprep.subr.mxu0 0.0
    %1906 = vmatpush1.msra.mxu0 0.0
    %1907 = vmatprep.subr.mxu0 0.0
    %1908 = vmatpush1.msra.mxu0 0.0
    %1909 = vmatprep.subr.mxu0 0.0
    %1910 = vmatpush1.msra.mxu0 0.0
    %1911 = vmatprep.subr.mxu0 0.0
    %1912 = vmatpush1.msra.mxu0 0.0
    %1913 = vmatprep.subr.mxu0 0.0
    %1914 = vmatpush1.msra.mxu0 0.0
    %1915 = vmatprep.subr.mxu0 0.0
    %1916 = vmatpush1.msra.mxu0 0.0
    %1917 = vmatprep.subr.mxu0 0.0
    %1918 = vmatpush1.msra.mxu0 0.0
    %1919 = vmatprep.subr.mxu0 0.0
    %1920 = vmatpush1.msra.mxu0 0.0
    %1921 = vmatprep.subr.mxu0 0.0
    %1922 = vmatpush1.msra.mxu0 0.0
    %1923 = vmatprep.subr.mxu0 0.0
    %1924 = vmatpush1.msra.mxu0 0.0
    %1925 = vmatprep.mubr.f32.mxu0 0.0
    %1926 = vmatmul.mubr.f32.gmra.mrb[0].mxu0 %v1853
    %v1927 = vpop.f32.mrb[0].mxu0
    %v1928 = vadd.f32 0.0, %v1927
    %v1929 = vpop.f32.mrb[0].mxu0
    %1930 = vmatprep.mubr.f32.mxu0 0.0
    %1931 = vmatmul.mubr.f32.gmra.mrb[0].mxu0 %v1856
    %v1932 = vpop.f32.mrb[0].mxu0
    %v1933 = vadd.f32 0.0, %v1932
    %v1934 = vpop.f32.mrb[0].mxu0
    %1935 = vdwg.mxu0
    %v1936 = vadd.f32 %v1849, %v1928
    %v1937 = vadd.f32 %v1850, %v1933
    %v1938 = vld [vmem:[%s17] sm:$0xff]
    %v1939 = vld [vmem:[%s17 + $0x8] sm:$0xff]
    %v1940 = vld [vmem:[%s19] sm:$0xff]
    %v1941 = vld [vmem:[%s19 + $0x8] sm:$0xf]
    %vm1942 = vcmask 97280
    %v1944 = vsel %vm1942, %v1938, 0
    %v1947 = vsel %vm1942, %v1939, 0
    %v1950 = vsel %vm1049, %v1941, 0
    %1952 = vmatprep.subr.mxu0 0.0
    %1953 = vmatpush1.msra.mxu0 %v1940
    %1954 = vmatprep.subr.mxu0 0.0
    %1955 = vmatpush1.msra.mxu0 %v1950
    %1956 = vmatprep.subr.mxu0 0.0
    %1957 = vmatpush1.msra.mxu0 0.0
    %1958 = vmatprep.subr.mxu0 0.0
    %1959 = vmatpush1.msra.mxu0 0.0
    %1960 = vmatprep.subr.mxu0 0.0
    %1961 = vmatpush1.msra.mxu0 0.0
    %1962 = vmatprep.subr.mxu0 0.0
    %1963 = vmatpush1.msra.mxu0 0.0
    %1964 = vmatprep.subr.mxu0 0.0
    %1965 = vmatpush1.msra.mxu0 0.0
    %1966 = vmatprep.subr.mxu0 0.0
    %1967 = vmatpush1.msra.mxu0 0.0
    %1968 = vmatprep.subr.mxu0 0.0
    %1969 = vmatpush1.msra.mxu0 0.0
    %1970 = vmatprep.subr.mxu0 0.0
    %1971 = vmatpush1.msra.mxu0 0.0
    %1972 = vmatprep.subr.mxu0 0.0
    %1973 = vmatpush1.msra.mxu0 0.0
    %1974 = vmatprep.subr.mxu0 0.0
    %1975 = vmatpush1.msra.mxu0 0.0
    %1976 = vmatprep.subr.mxu0 0.0
    %1977 = vmatpush1.msra.mxu0 0.0
    %1978 = vmatprep.subr.mxu0 0.0
    %1979 = vmatpush1.msra.mxu0 0.0
    %1980 = vmatprep.subr.mxu0 0.0
    %1981 = vmatpush1.msra.mxu0 0.0
    %1982 = vmatprep.subr.mxu0 0.0
    %1983 = vmatpush1.msra.mxu0 0.0
    %1984 = vmatprep.subr.mxu0 0.0
    %1985 = vmatpush1.msra.mxu0 0.0
    %1986 = vmatprep.subr.mxu0 0.0
    %1987 = vmatpush1.msra.mxu0 0.0
    %1988 = vmatprep.subr.mxu0 0.0
    %1989 = vmatpush1.msra.mxu0 0.0
    %1990 = vmatprep.subr.mxu0 0.0
    %1991 = vmatpush1.msra.mxu0 0.0
    %1992 = vmatprep.subr.mxu0 0.0
    %1993 = vmatpush1.msra.mxu0 0.0
    %1994 = vmatprep.subr.mxu0 0.0
    %1995 = vmatpush1.msra.mxu0 0.0
    %1996 = vmatprep.subr.mxu0 0.0
    %1997 = vmatpush1.msra.mxu0 0.0
    %1998 = vmatprep.subr.mxu0 0.0
    %1999 = vmatpush1.msra.mxu0 0.0
    %2000 = vmatprep.subr.mxu0 0.0
    %2001 = vmatpush1.msra.mxu0 0.0
    %2002 = vmatprep.subr.mxu0 0.0
    %2003 = vmatpush1.msra.mxu0 0.0
    %2004 = vmatprep.subr.mxu0 0.0
    %2005 = vmatpush1.msra.mxu0 0.0
    %2006 = vmatprep.subr.mxu0 0.0
    %2007 = vmatpush1.msra.mxu0 0.0
    %2008 = vmatprep.subr.mxu0 0.0
    %2009 = vmatpush1.msra.mxu0 0.0
    %2010 = vmatprep.subr.mxu0 0.0
    %2011 = vmatpush1.msra.mxu0 0.0
    %2012 = vmatprep.subr.mxu0 0.0
    %2013 = vmatpush1.msra.mxu0 0.0
    %2014 = vmatprep.subr.mxu0 0.0
    %2015 = vmatpush1.msra.mxu0 0.0
    %2016 = vmatprep.mubr.f32.mxu0 0.0
    %2017 = vmatmul.mubr.f32.gmra.mrb[0].mxu0 %v1944
    %v2018 = vpop.f32.mrb[0].mxu0
    %v2019 = vadd.f32 0.0, %v2018
    %v2020 = vpop.f32.mrb[0].mxu0
    %2021 = vmatprep.mubr.f32.mxu0 0.0
    %2022 = vmatmul.mubr.f32.gmra.mrb[0].mxu0 %v1947
    %v2023 = vpop.f32.mrb[0].mxu0
    %v2024 = vadd.f32 0.0, %v2023
    %v2025 = vpop.f32.mrb[0].mxu0
    %2026 = vdwg.mxu0
    %v2027 = vadd.f32 %v1936, %v2019
    %v2028 = vadd.f32 %v1937, %v2024
    %2029 = vst.msk [vmem:[#allocation2] sm:$0xff] %vm1942, %v2027
    %2030 = vst.msk [vmem:[#allocation2 + $0x8] sm:$0xff] %vm1942, %v2028
    %v2031 = vld [vmem:[%s15] sm:$0xff]
    %v2032 = vld [vmem:[%s15 + $0x8] sm:$0xff]
    %v2033 = vld [vmem:[%s23] sm:$0xff]
    %v2034 = vld [vmem:[%s23 + $0x8] sm:$0xf]
    %v2036 = vsel %vm1942, %v2027, 0
    %v2039 = vsel %vm1942, %v2028, 0
    %v2042 = vsel %vm1049, %v2034, 0
    %2044 = vmatprep.subr.mxu0 0.0
    %2045 = vmatpush1.msra.mxu0 %v2033
    %2046 = vmatprep.subr.mxu0 0.0
    %2047 = vmatpush1.msra.mxu0 %v2042
    %2048 = vmatprep.subr.mxu0 0.0
    %2049 = vmatpush1.msra.mxu0 0.0
    %2050 = vmatprep.subr.mxu0 0.0
    %2051 = vmatpush1.msra.mxu0 0.0
    %2052 = vmatprep.subr.mxu0 0.0
    %2053 = vmatpush1.msra.mxu0 0.0
    %2054 = vmatprep.subr.mxu0 0.0
    %2055 = vmatpush1.msra.mxu0 0.0
    %2056 = vmatprep.subr.mxu0 0.0
    %2057 = vmatpush1.msra.mxu0 0.0
    %2058 = vmatprep.subr.mxu0 0.0
    %2059 = vmatpush1.msra.mxu0 0.0
    %2060 = vmatprep.subr.mxu0 0.0
    %2061 = vmatpush1.msra.mxu0 0.0
    %2062 = vmatprep.subr.mxu0 0.0
    %2063 = vmatpush1.msra.mxu0 0.0
    %2064 = vmatprep.subr.mxu0 0.0
    %2065 = vmatpush1.msra.mxu0 0.0
    %2066 = vmatprep.subr.mxu0 0.0
    %2067 = vmatpush1.msra.mxu0 0.0
    %2068 = vmatprep.subr.mxu0 0.0
    %2069 = vmatpush1.msra.mxu0 0.0
    %2070 = vmatprep.subr.mxu0 0.0
    %2071 = vmatpush1.msra.mxu0 0.0
    %2072 = vmatprep.subr.mxu0 0.0
    %2073 = vmatpush1.msra.mxu0 0.0
    %2074 = vmatprep.subr.mxu0 0.0
    %2075 = vmatpush1.msra.mxu0 0.0
    %2076 = vmatprep.subr.mxu0 0.0
    %2077 = vmatpush1.msra.mxu0 0.0
    %2078 = vmatprep.subr.mxu0 0.0
    %2079 = vmatpush1.msra.mxu0 0.0
    %2080 = vmatprep.subr.mxu0 0.0
    %2081 = vmatpush1.msra.mxu0 0.0
    %2082 = vmatprep.subr.mxu0 0.0
    %2083 = vmatpush1.msra.mxu0 0.0
    %2084 = vmatprep.subr.mxu0 0.0
    %2085 = vmatpush1.msra.mxu0 0.0
    %2086 = vmatprep.subr.mxu0 0.0
    %2087 = vmatpush1.msra.mxu0 0.0
    %2088 = vmatprep.subr.mxu0 0.0
    %2089 = vmatpush1.msra.mxu0 0.0
    %2090 = vmatprep.subr.mxu0 0.0
    %2091 = vmatpush1.msra.mxu0 0.0
    %2092 = vmatprep.subr.mxu0 0.0
    %2093 = vmatpush1.msra.mxu0 0.0
    %2094 = vmatprep.subr.mxu0 0.0
    %2095 = vmatpush1.msra.mxu0 0.0
    %2096 = vmatprep.subr.mxu0 0.0
    %2097 = vmatpush1.msra.mxu0 0.0
    %2098 = vmatprep.subr.mxu0 0.0
    %2099 = vmatpush1.msra.mxu0 0.0
    %2100 = vmatprep.subr.mxu0 0.0
    %2101 = vmatpush1.msra.mxu0 0.0
    %2102 = vmatprep.subr.mxu0 0.0
    %2103 = vmatpush1.msra.mxu0 0.0
    %2104 = vmatprep.subr.mxu0 0.0
    %2105 = vmatpush1.msra.mxu0 0.0
    %2106 = vmatprep.subr.mxu0 0.0
    %2107 = vmatpush1.msra.mxu0 0.0
    %2108 = vmatprep.mubr.f32.mxu0 0.0
    %2109 = vmatmul.mubr.f32.gmra.mrb[0].mxu0 %v2036
    %v2110 = vpop.f32.mrb[0].mxu0
    %v2111 = vadd.f32 0.0, %v2110
    %v2112 = vpop.f32.mrb[0].mxu0
    %2113 = vmatprep.mubr.f32.mxu0 0.0
    %2114 = vmatmul.mubr.f32.gmra.mrb[0].mxu0 %v2039
    %v2115 = vpop.f32.mrb[0].mxu0
    %v2116 = vadd.f32 0.0, %v2115
    %v2117 = vpop.f32.mrb[0].mxu0
    %2118 = vdwg.mxu0
    %v2119 = vadd.f32 %v2031, %v2111
    %v2120 = vadd.f32 %v2032, %v2116
    %v2121 = vld [vmem:[%s25] sm:$0xf]
    %v2122 = vld [vmem:[%s27] sm:$0xff]
    %v2123 = vld [vmem:[%s27 + $0x8] sm:$0xf]
    %v2125 = vsel %vm1942, %v2119, 0
    %v2128 = vsel %vm1942, %v2120, 0
    %v2131 = vsel %vm1049, %v2123, 0
    %2133 = vmatprep.subr.mxu0 0.0
    %2134 = vmatpush1.msra.mxu0 %v2122
    %2135 = vmatprep.subr.mxu0 0.0
    %2136 = vmatpush1.msra.mxu0 %v2131
    %2137 = vmatprep.subr.mxu0 0.0
    %2138 = vmatpush1.msra.mxu0 0.0
    %2139 = vmatprep.subr.mxu0 0.0
    %2140 = vmatpush1.msra.mxu0 0.0
    %2141 = vmatprep.subr.mxu0 0.0
    %2142 = vmatpush1.msra.mxu0 0.0
    %2143 = vmatprep.subr.mxu0 0.0
    %2144 = vmatpush1.msra.mxu0 0.0
    %2145 = vmatprep.subr.mxu0 0.0
    %2146 = vmatpush1.msra.mxu0 0.0
    %2147 = vmatprep.subr.mxu0 0.0
    %2148 = vmatpush1.msra.mxu0 0.0
    %2149 = vmatprep.subr.mxu0 0.0
    %2150 = vmatpush1.msra.mxu0 0.0
    %2151 = vmatprep.subr.mxu0 0.0
    %2152 = vmatpush1.msra.mxu0 0.0
    %2153 = vmatprep.subr.mxu0 0.0
    %2154 = vmatpush1.msra.mxu0 0.0
    %2155 = vmatprep.subr.mxu0 0.0
    %2156 = vmatpush1.msra.mxu0 0.0
    %2157 = vmatprep.subr.mxu0 0.0
    %2158 = vmatpush1.msra.mxu0 0.0
    %2159 = vmatprep.subr.mxu0 0.0
    %2160 = vmatpush1.msra.mxu0 0.0
    %2161 = vmatprep.subr.mxu0 0.0
    %2162 = vmatpush1.msra.mxu0 0.0
    %2163 = vmatprep.subr.mxu0 0.0
    %2164 = vmatpush1.msra.mxu0 0.0
    %2165 = vmatprep.subr.mxu0 0.0
    %2166 = vmatpush1.msra.mxu0 0.0
    %2167 = vmatprep.subr.mxu0 0.0
    %2168 = vmatpush1.msra.mxu0 0.0
    %2169 = vmatprep.subr.mxu0 0.0
    %2170 = vmatpush1.msra.mxu0 0.0
    %2171 = vmatprep.subr.mxu0 0.0
    %2172 = vmatpush1.msra.mxu0 0.0
    %2173 = vmatprep.subr.mxu0 0.0
    %2174 = vmatpush1.msra.mxu0 0.0
    %2175 = vmatprep.subr.mxu0 0.0
    %2176 = vmatpush1.msra.mxu0 0.0
    %2177 = vmatprep.subr.mxu0 0.0
    %2178 = vmatpush1.msra.mxu0 0.0
    %2179 = vmatprep.subr.mxu0 0.0
    %2180 = vmatpush1.msra.mxu0 0.0
    %2181 = vmatprep.subr.mxu0 0.0
    %2182 = vmatpush1.msra.mxu0 0.0
    %2183 = vmatprep.subr.mxu0 0.0
    %2184 = vmatpush1.msra.mxu0 0.0
    %2185 = vmatprep.subr.mxu0 0.0
    %2186 = vmatpush1.msra.mxu0 0.0
    %2187 = vmatprep.subr.mxu0 0.0
    %2188 = vmatpush1.msra.mxu0 0.0
    %2189 = vmatprep.subr.mxu0 0.0
    %2190 = vmatpush1.msra.mxu0 0.0
    %2191 = vmatprep.subr.mxu0 0.0
    %2192 = vmatpush1.msra.mxu0 0.0
    %2193 = vmatprep.subr.mxu0 0.0
    %2194 = vmatpush1.msra.mxu0 0.0
    %2195 = vmatprep.subr.mxu0 0.0
    %2196 = vmatpush1.msra.mxu0 0.0
    %2197 = vmatprep.mubr.f32.mxu0 0.0
    %2198 = vmatmul.mubr.f32.gmra.mrb[0].mxu0 %v2125
    %v2199 = vpop.f32.mrb[0].mxu0
    %v2200 = vadd.f32 0.0, %v2199
    %v2201 = vpop.f32.mrb[0].mxu0
    %2202 = vmatprep.mubr.f32.mxu0 0.0
    %2203 = vmatmul.mubr.f32.gmra.mrb[0].mxu0 %v2128
    %v2204 = vpop.f32.mrb[0].mxu0
    %v2205 = vadd.f32 0.0, %v2204
    %v2206 = vpop.f32.mrb[0].mxu0
    %2207 = vdwg.mxu0
    %2210 = vrot.lane.b32.xlu0 %v1642, 127
    %v2211 = vpop.permute.xlu0 %2210
    %2212 = vrot.lane.b32.xlu0 %v1645, 127
    %v2213 = vpop.permute.xlu0 %2212
    %v2214 = vsel %vm1766, %v2211, 0
    %v2216 = vsel %vm1766, %v2213, 0
    %v2219 = vsel %vm1049, %v2121, 0
    %2221 = vmatprep.subr.mxu0 0.0
    %2222 = vmatpush1.msra.mxu0 %v2219
    %2223 = vmatprep.subr.mxu0 0.0
    %2224 = vmatpush1.msra.mxu0 0.0
    %2225 = vmatprep.subr.mxu0 0.0
    %2226 = vmatpush1.msra.mxu0 0.0
    %2227 = vmatprep.subr.mxu0 0.0
    %2228 = vmatpush1.msra.mxu0 0.0
    %2229 = vmatprep.subr.mxu0 0.0
    %2230 = vmatpush1.msra.mxu0 0.0
    %2231 = vmatprep.subr.mxu0 0.0
    %2232 = vmatpush1.msra.mxu0 0.0
    %2233 = vmatprep.subr.mxu0 0.0
    %2234 = vmatpush1.msra.mxu0 0.0
    %2235 = vmatprep.subr.mxu0 0.0
    %2236 = vmatpush1.msra.mxu0 0.0
    %2237 = vmatprep.subr.mxu0 0.0
    %2238 = vmatpush1.msra.mxu0 0.0
    %2239 = vmatprep.subr.mxu0 0.0
    %2240 = vmatpush1.msra.mxu0 0.0
    %2241 = vmatprep.subr.mxu0 0.0
    %2242 = vmatpush1.msra.mxu0 0.0
    %2243 = vmatprep.subr.mxu0 0.0
    %2244 = vmatpush1.msra.mxu0 0.0
    %2245 = vmatprep.subr.mxu0 0.0
    %2246 = vmatpush1.msra.mxu0 0.0
    %2247 = vmatprep.subr.mxu0 0.0
    %2248 = vmatpush1.msra.mxu0 0.0
    %2249 = vmatprep.subr.mxu0 0.0
    %2250 = vmatpush1.msra.mxu0 0.0
    %2251 = vmatprep.subr.mxu0 0.0
    %2252 = vmatpush1.msra.mxu0 0.0
    %2253 = vmatprep.subr.mxu0 0.0
    %2254 = vmatpush1.msra.mxu0 0.0
    %2255 = vmatprep.subr.mxu0 0.0
    %2256 = vmatpush1.msra.mxu0 0.0
    %2257 = vmatprep.subr.mxu0 0.0
    %2258 = vmatpush1.msra.mxu0 0.0
    %2259 = vmatprep.subr.mxu0 0.0
    %2260 = vmatpush1.msra.mxu0 0.0
    %2261 = vmatprep.subr.mxu0 0.0
    %2262 = vmatpush1.msra.mxu0 0.0
    %2263 = vmatprep.subr.mxu0 0.0
    %2264 = vmatpush1.msra.mxu0 0.0
    %2265 = vmatprep.subr.mxu0 0.0
    %2266 = vmatpush1.msra.mxu0 0.0
    %2267 = vmatprep.subr.mxu0 0.0
    %2268 = vmatpush1.msra.mxu0 0.0
    %2269 = vmatprep.subr.mxu0 0.0
    %2270 = vmatpush1.msra.mxu0 0.0
    %2271 = vmatprep.subr.mxu0 0.0
    %2272 = vmatpush1.msra.mxu0 0.0
    %2273 = vmatprep.subr.mxu0 0.0
    %2274 = vmatpush1.msra.mxu0 0.0
    %2275 = vmatprep.subr.mxu0 0.0
    %2276 = vmatpush1.msra.mxu0 0.0
    %2277 = vmatprep.subr.mxu0 0.0
    %2278 = vmatpush1.msra.mxu0 0.0
    %2279 = vmatprep.subr.mxu0 0.0
    %2280 = vmatpush1.msra.mxu0 0.0
    %2281 = vmatprep.subr.mxu0 0.0
    %2282 = vmatpush1.msra.mxu0 0.0
    %2283 = vmatprep.subr.mxu0 0.0
    %2284 = vmatpush1.msra.mxu0 0.0
    %2285 = vmatprep.mubr.f32.mxu0 0.0
    %2286 = vmatmul.mubr.f32.gmra.mrb[0].mxu0 %v2214
    %v2287 = vpop.f32.mrb[0].mxu0
    %v2288 = vadd.f32 %v2200, %v2287
    %v2289 = vpop.f32.mrb[0].mxu0
    %2290 = vmatprep.mubr.f32.mxu0 0.0
    %2291 = vmatmul.mubr.f32.gmra.mrb[0].mxu0 %v2216
    %v2292 = vpop.f32.mrb[0].mxu0
    %v2293 = vadd.f32 %v2205, %v2292
    %v2294 = vpop.f32.mrb[0].mxu0
    %2295 = vdwg.mxu0
    %2296 = vst.msk [vmem:[#allocation4] sm:$0xff] %vm1942, %v2288
    %2297 = vst.msk [vmem:[#allocation4 + $0x8] sm:$0xff] %vm1942, %v2293
    // Predicated region
    $region146: #{tpu_custom_call.1} parent=1 // pred_check
      _
    $region147: #{tpu_custom_call.1} parent=1 // pred_check_branch
      %2299 = sbr.rel (0) target = $region149
    $region148: #{tpu_custom_call.1} parent=1 // pred_region
      %s2301 = ssub.s32 256, 256
      %2302 = vsyncadd [#allocation3], %s2301
      %s2303 = sshll.u32 [#allocation2], 4
      %s2304 = int_to_ptr.vmem [resolvable:$true] %s2303
      %2309 = dma.vmem_to_hbm [thread:$0]  %s2304, 256, %s73, [#allocation3], 128, 128, 8
    $region149: #{tpu_custom_call.1} parent=1 // pred_fallthru
      _
    // Predicated region
    $region150: #{tpu_custom_call.1} parent=1 // pred_check
      _
    $region151: #{tpu_custom_call.1} parent=1 // pred_check_branch
      %2311 = sbr.rel (0) target = $region153
    $region152: #{tpu_custom_call.1} parent=1 // pred_region
      _
    $region153: #{tpu_custom_call.1} parent=1 // pred_fallthru
      _
    // Predicated region
    $region154: #{tpu_custom_call.1} parent=1 // pred_check
      _
    $region155: #{tpu_custom_call.1} parent=1 // pred_check_branch
      %2313 = sbr.rel (0) target = $region157
    $region156: #{tpu_custom_call.1} parent=1 // pred_region
      %s2315 = ssub.s32 256, 256
      %2316 = vsyncadd [#allocation5], %s2315
      %s2317 = sshll.u32 [#allocation4], 4
      %s2318 = int_to_ptr.vmem [resolvable:$true] %s2317
      %2323 = dma.vmem_to_hbm [thread:$0]  %s2318, 256, %s77, [#allocation5], 128, 128, 8
    $region157: #{tpu_custom_call.1} parent=1 // pred_fallthru
      _
    // Predicated region
    $region158: #{tpu_custom_call.1} parent=1 // pred_check
      _
    $region159: #{tpu_custom_call.1} parent=1 // pred_check_branch
      %2325 = sbr.rel (0) target = $region161
    $region160: #{tpu_custom_call.1} parent=1 // pred_region
      %2326 = dma.done [#allocation3], 256
    $region161: #{tpu_custom_call.1} parent=1 // pred_fallthru
      _
    // Predicated region
    $region162: #{tpu_custom_call.1} parent=1 // pred_check
      _
    $region163: #{tpu_custom_call.1} parent=1 // pred_check_branch
      %2328 = sbr.rel (0) target = $region165
    $region164: #{tpu_custom_call.1} parent=1 // pred_region
      _
    $region165: #{tpu_custom_call.1} parent=1 // pred_fallthru
      _
    // Predicated region
    $region166: #{tpu_custom_call.1} parent=1 // pred_check
      _
    $region167: #{tpu_custom_call.1} parent=1 // pred_check_branch
      %2330 = sbr.rel (0) target = $region169
    $region168: #{tpu_custom_call.1} parent=1 // pred_region
      %2331 = dma.done [#allocation5], 256
    $region169: #{tpu_custom_call.1} parent=1 // pred_fallthru
      _
    %2332 = vsyncpa [#allocation3], 1
    %2333 = vsyncpa [#allocation5], 1

</llo_original>
